<compile_context>
chip_gen: v7x
topology: tpu7x:2x2x1
jax: 0.10.0
libtpu: 0.0.40
codegen_flags: <defaults>
</compile_context>

<pallas_src>
import functools
import math

import jax
import jax.numpy as jnp
from jax.experimental import pallas as pl
from jax.experimental.pallas import tpu as pltpu


def _round_up(a, b):
    return ((a + b - 1) // b) * b


def _vmem_limit_bytes():
    """Generation-aware scoped-VMEM budget (per TensorCore)."""
    try:
        cap = int(pltpu.get_tpu_info().vmem_capacity_bytes)
    except Exception:  # conservative fallback if the query is unavailable
        cap = 128 * 1024 * 1024
    # ~48 MiB on v7x (64 MiB/TC), ~96 MiB on v5e/v6e (128 MiB).
    return max(32 * 1024 * 1024, min(cap * 3 // 4, 128 * 1024 * 1024))


def _choose_batch_block(batch, c_in, target_rows=256):
    """Pick the batch block TB so the folded Chebyshev-matmul M-dim TB*C_in is
    sublane-aligned and ~target_rows (fills a 256-wide MXU pass), never exceeds
    the (padded) batch, and prefers >= 2 grid steps (both v7x TensorCores)."""
    m = 8 // math.gcd(c_in, 8)                 # TB granularity for 8-sublane alignment
    tb = m * max(1, target_rows // (m * c_in))
    tb = min(tb, _round_up(batch, m))
    if batch > 1 and _round_up(batch, tb) // tb < 2:
        cand = _round_up((batch + 1) // 2, m)
        if m <= cand < tb:
            tb = cand
    b_pad = _round_up(batch, tb)
    return tb, b_pad


# --------------------------------------------------------------------------
# Stage 1: one-shot graph-level precompute (supports^T + per-node bias^T)
# --------------------------------------------------------------------------
def _graph_precompute_kernel(e_ref, et_ref, bpt_ref, supt_ref, bt_ref, *,
                             cheb_k, n_real):
    E = e_ref[...]                       # (Np, D), zero rows for padded nodes
    ET = et_ref[...]                     # (D, Np)
    n_pad = E.shape[0]

    # support^T directly: E @ E^T is symmetric, so the transpose of the
    # row-softmax equals a column-softmax of the same relu'd logits.
    logits = jnp.maximum(jnp.dot(E, ET, preferred_element_type=jnp.float32), 0.0)
    # relu keeps every logit >= 0 and padded rows hold exactly 0, so the plain
    # column max already equals the max over the real rows.
    m = jnp.max(logits, axis=0, keepdims=True)
    p = jnp.exp(logits - m)
    if n_real < n_pad:
        # Zero padded source rows: they must contribute neither to the softmax
        # denominator nor to the Chebyshev recursion's real block.
        row_ids = jax.lax.broadcasted_iota(jnp.int32, (n_pad, n_pad), 0)
        p = jnp.where(row_ids < n_real, p, 0.0)
    denom = jnp.sum(p, axis=0, keepdims=True)
    st = p * pl.reciprocal(denom, approx=False)          # S^T, (Np, Np)

    # Chebyshev recursion in the transposed domain; the identity (k = 0) term is
    # NOT stored — it is applied implicitly in the propagate kernel.
    #   T_k^T = 2 * T_{k-1}^T @ S^T - T_{k-2}^T
    supt_ref[0] = st
    if cheb_k > 2:
        t_prev2 = jnp.eye(n_pad, dtype=jnp.float32)
        t_prev1 = st
        for k in range(2, cheb_k):
            t_k = 2.0 * jnp.dot(t_prev1, st,
                                preferred_element_type=jnp.float32) - t_prev2
            supt_ref[k - 1] = t_k
            t_prev2, t_prev1 = t_prev1, t_k

    # Per-node bias, lane-dense: b_T[o, n] = sum_d bias_pool[d, o] * E[n, d]
    bt_ref[...] = jnp.dot(bpt_ref[...], ET, preferred_element_type=jnp.float32)


# --------------------------------------------------------------------------
# Stage 2: per-batch-block Chebyshev propagation + MXU channel mixing
# --------------------------------------------------------------------------
def _propagate_kernel(xt_ref, supt_ref, wp2_ref, et_ref, bt_ref, o_ref, *,
                      cheb_k, c_in, c_out, embed_dim, tb):
    """Block layouts (all lane-dense along the padded node axis Np):
      xt_ref  : (TB*Ci, Np)      x^T rows ordered (b, i)
      supt_ref: (K-1, Np, Np)    transposed Chebyshev supports (no identity)
      wp2_ref : (K, D*Co, Ci)    weights_pool, node-/batch-invariant, MXU layout
      et_ref  : (D, Np)          node_embedding^T
      bt_ref  : (Co, Np)         per-node bias, transposed
      o_ref   : (TB, Co, Np)     output block (wrapper slices + transposes back)
    """
    n = xt_ref.shape[-1]
    xt = xt_ref[...]                                     # (TB*Ci, Np)

    # Chebyshev propagation: ONE MXU matmul per order covers all TB batch
    # elements (k == 0 is the identity support -> no matmul at all).
    xg = [xt]
    for k in range(1, cheb_k):
        xg.append(jnp.dot(xt, supt_ref[k - 1],
                          preferred_element_type=jnp.float32))

    et = et_ref[...]                                     # (D, Np)
    bt = bt_ref[...]                                     # (Co, Np)
    for b in range(tb):
        # Per-node channel mixing on the MXU:
        #   y[(d,o), n] = sum_{k,i} weights_pool[d,k,i,o] * x_g[b,k,n,i]
        y = None
        for k in range(cheb_k):
            xkb = xg[k][b * c_in:(b + 1) * c_in, :]                     # (Ci, Np)
            contrib = jnp.dot(wp2_ref[k], xkb,
                              preferred_element_type=jnp.float32)       # (D*Co, Np)
            y = contrib if y is None else y + contrib
        # Cheap D-term reduction against E^T: reduction over a MAJOR axis ->
        # plain vreg adds on the VPU (no cross-lane XLU work), then bias.
        yd = y.reshape(embed_dim, c_out, n)                             # (D, Co, Np)
        out_b = jnp.sum(yd * et[:, None, :], axis=0) + bt               # (Co, Np)
        o_ref[b] = out_b.astype(o_ref.dtype)


# --------------------------------------------------------------------------
# Wrapper
# --------------------------------------------------------------------------
@functools.partial(jax.jit, static_argnums=(4,))
def avwgcn_pallas(x, node_embedding, weights_pool, bias_pool, cheb_k):
    B, N, C_in = x.shape
    D = node_embedding.shape[1]
    C_out = bias_pool.shape[1]
    assert cheb_k >= 2, "AVWGCN Chebyshev order must be >= 2"

    vmem_limit = _vmem_limit_bytes()
    n_pad = _round_up(N, 128)            # lane-dense node axis everywhere

    # Wrapper-side layout plumbing (pure pads / transposes, done once in XLA).
    e_pad = jnp.pad(node_embedding.astype(jnp.float32), ((0, n_pad - N), (0, 0)))
    et_pad = e_pad.T                                             # (D, Np)
    bpt = bias_pool.astype(jnp.float32).T                        # (Co, D)

    # --- Stage 1: one-shot graph-level precompute ---------------------------
    stage1_bytes = (2 * (cheb_k - 1) + 5) * n_pad * n_pad * 4
    if stage1_bytes <= (vmem_limit * 3) // 5:
        supt, bt = pl.pallas_call(
            functools.partial(_graph_precompute_kernel, cheb_k=cheb_k, n_real=N),
            out_shape=(
                jax.ShapeDtypeStruct((cheb_k - 1, n_pad, n_pad), jnp.float32),
                jax.ShapeDtypeStruct((C_out, n_pad), jnp.float32),
            ),
            grid_spec=pltpu.PrefetchScalarGridSpec(
                num_scalar_prefetch=0,
                grid=(1,),
                in_specs=[
                    pl.BlockSpec((n_pad, D), lambda i: (0, 0)),
                    pl.BlockSpec((D, n_pad), lambda i: (0, 0)),
                    pl.BlockSpec((C_out, D), lambda i: (0, 0)),
                ],
                out_specs=[
                    pl.BlockSpec((cheb_k - 1, n_pad, n_pad), lambda i: (0, 0, 0)),
                    pl.BlockSpec((C_out, n_pad), lambda i: (0, 0)),
                ],
            ),
            compiler_params=pltpu.CompilerParams(
                dimension_semantics=("arbitrary",),
                vmem_limit_bytes=vmem_limit,
            ),
        )(e_pad, et_pad, bpt)
    else:
        # Very large graphs: the one-shot precompute does not fit a single VMEM
        # footprint; it is off the hot loop, so plain XLA costs nothing.
        logits = jnp.maximum(e_pad @ et_pad, 0.0)
        p = jnp.exp(logits - jnp.max(logits, axis=0, keepdims=True))
        p = jnp.where((jnp.arange(n_pad) < N)[:, None], p, 0.0)
        st = p / jnp.sum(p, axis=0, keepdims=True)
        sup = [st]
        if cheb_k > 2:
            t_prev2, t_prev1 = jnp.eye(n_pad, dtype=jnp.float32), st
            for _ in range(2, cheb_k):
                t_k = 2.0 * (t_prev1 @ st) - t_prev2
                sup.append(t_k)
                t_prev2, t_prev1 = t_prev1, t_k
        supt = jnp.stack(sup, axis=0)
        bt = bpt @ et_pad

    # --- Stage 2: batched propagation + MXU channel mixing -------------------
    tb, b_pad = _choose_batch_block(B, C_in)
    xt = x.astype(jnp.float32).transpose(0, 2, 1)                 # (B, Ci, N)
    xt = jnp.pad(xt, ((0, b_pad - B), (0, 0), (0, n_pad - N)))
    xt = xt.reshape(b_pad * C_in, n_pad)                          # rows (b, i)

    # weights_pool (D, K, Ci, Co) -> (K, D*Co, Ci): node- AND batch-invariant,
    # lives in VMEM once; drives the MXU mixing matmuls.
    wp2 = weights_pool.astype(jnp.float32).transpose(1, 0, 3, 2).reshape(
        cheb_k, D * C_out, C_in)

    out_t = pl.pallas_call(
        functools.partial(_propagate_kernel, cheb_k=cheb_k, c_in=C_in,
                          c_out=C_out, embed_dim=D, tb=tb),
        out_shape=jax.ShapeDtypeStruct((b_pad, C_out, n_pad), jnp.float32),
        grid_spec=pltpu.PrefetchScalarGridSpec(
            num_scalar_prefetch=0,
            grid=(b_pad // tb,),
            in_specs=[
                pl.BlockSpec((tb * C_in, n_pad), lambda b: (b, 0)),
                # Batch-invariant operands: constant block index + single buffer
                # (fetched once, kept resident, no VMEM doubling).
                pl.BlockSpec((cheb_k - 1, n_pad, n_pad), lambda b: (0, 0, 0),
                             pipeline_mode=pl.Buffered(1)),
                pl.BlockSpec((cheb_k, D * C_out, C_in), lambda b: (0, 0, 0),
                             pipeline_mode=pl.Buffered(1)),
                pl.BlockSpec((D, n_pad), lambda b: (0, 0),
                             pipeline_mode=pl.Buffered(1)),
                pl.BlockSpec((C_out, n_pad), lambda b: (0, 0),
                             pipeline_mode=pl.Buffered(1)),
            ],
            out_specs=pl.BlockSpec((tb, C_out, n_pad), lambda b: (b, 0, 0)),
        ),
        compiler_params=pltpu.CompilerParams(
            # No cross-iteration scratch carry -> the batch axis is safely
            # 'parallel' (megacore sharding on v7x).
            dimension_semantics=("parallel",),
            vmem_limit_bytes=vmem_limit,
        ),
    )(xt, supt, wp2, et_pad, bt)

    # Lane-dense (Bpad, Co, Np) -> module layout (B, N, Co): layout plumbing only.
    return out_t[:B, :, :N].transpose(0, 2, 1)


def avwgcn_reference(x, E, weights_pool, bias_pool, cheb_k):
    """Pure-JAX reference mirroring the PyTorch forward (non-Garnoldi path)."""
    support = jax.nn.softmax(jax.nn.relu(E @ E.T), axis=1)
    N = E.shape[0]
    sup = [jnp.eye(N, dtype=support.dtype), support]
    for _ in range(2, cheb_k):
        sup.append(2.0 * support @ sup[-1] - sup[-2])
    supports = jnp.stack(sup, axis=0)                                # (K, N, N)
    weights = jnp.einsum('nd,dkio->nkio', E, weights_pool)           # (N, K, Ci, Co)
    bias = E @ bias_pool                                             # (N, Co)
    x_g = jnp.einsum('knm,bmc->bknc', supports, x).transpose(0, 2, 1, 3)
    return jnp.einsum('bnki,nkio->bno', x_g, weights) + bias


if __name__ == "__main__":
    # Small shapes consistent with the module: x (B, N, C_in), embedding (N, D)
    B, N, C_in, C_out, cheb_k, embed_dim = 2, 16, 4, 8, 3, 16

    key = jax.random.PRNGKey(0)
    kx, ke, kw, kb = jax.random.split(key, 4)
    x = jax.random.normal(kx, (B, N, C_in), dtype=jnp.float32)
    node_embedding = jax.random.normal(ke, (N, embed_dim), dtype=jnp.float32) * 0.5
    weights_pool = jax.random.normal(kw, (embed_dim, cheb_k, C_in, C_out),
                                     dtype=jnp.float32) * 0.1
    bias_pool = jax.random.normal(kb, (embed_dim, C_out), dtype=jnp.float32) * 0.1

    out = avwgcn_pallas(x, node_embedding, weights_pool, bias_pool, cheb_k)
    out = jax.block_until_ready(out)

    ref = avwgcn_reference(x, node_embedding, weights_pool, bias_pool, cheb_k)
    assert out.shape == (B, N, C_out)
    assert jnp.allclose(out, ref, atol=1e-4, rtol=1e-4), \
        f"max abs err {jnp.max(jnp.abs(out - ref))}"

    print("KERNEL_OK")
</pallas_src>

<mosaic_0001>
module attributes {stable_mosaic.version = 11 : i64} {
  func.func @_graph_precompute_kernel(%arg0: i32, %arg1: memref<128x16xf32, #tpu.memory_space<vmem>>, %arg2: memref<16x128xf32, #tpu.memory_space<vmem>>, %arg3: memref<8x16xf32, #tpu.memory_space<vmem>>, %arg4: memref<2x128x128xf32, #tpu.memory_space<vmem>>, %arg5: memref<8x128xf32, #tpu.memory_space<vmem>>) attributes {dimension_semantics = [#tpu.dimension_semantics<arbitrary>], iteration_bounds = array<i64: 1>, scalar_prefetch = 0 : i64, scratch_operands = 0 : i64, tpu.core_type = #tpu.core_type<tc>, window_params = [{pipeline_mode = #tpu.pipeline_mode<synchronous>, transform_indices = @transform_0, window_bounds = array<i64: 128, 16>}, {pipeline_mode = #tpu.pipeline_mode<synchronous>, transform_indices = @transform_1, window_bounds = array<i64: 16, 128>}, {pipeline_mode = #tpu.pipeline_mode<synchronous>, transform_indices = @transform_2, window_bounds = array<i64: 8, 16>}, {pipeline_mode = #tpu.pipeline_mode<synchronous>, transform_indices = @transform_3, window_bounds = array<i64: 2, 128, 128>}, {pipeline_mode = #tpu.pipeline_mode<synchronous>, transform_indices = @transform_4, window_bounds = array<i64: 8, 128>}]} {
    %c0 = arith.constant 0 : index
    %c0_0 = arith.constant 0 : index
    %0 = vector.load %arg1[%c0, %c0_0] : memref<128x16xf32, #tpu.memory_space<vmem>>, vector<128x16xf32>
    %c0_1 = arith.constant 0 : index
    %c0_2 = arith.constant 0 : index
    %1 = vector.load %arg2[%c0_1, %c0_2] : memref<16x128xf32, #tpu.memory_space<vmem>>, vector<16x128xf32>
    %cst = arith.constant dense<0.000000e+00> : vector<128x128xf32>
    %2 = tpu.matmul %0, %1, %cst {dimension_numbers = #tpu.dot_dimension_numbers<[1], [0], [0], [1], [0, 0, 1, 1], [], []>} : vector<128x16xf32>, vector<16x128xf32>, vector<128x128xf32> -> vector<128x128xf32>
    %cst_3 = arith.constant 0.000000e+00 : f32
    %3 = vector.broadcast %cst_3 : f32 to vector<128x128xf32>
    %4 = arith.maximumf %2, %3 : vector<128x128xf32>
    %cst_4 = arith.constant dense<0xFF800000> : vector<128xf32>
    %5 = vector.multi_reduction <maximumf>, %4, %cst_4 [0] : vector<128x128xf32> to vector<128xf32>
    %6 = vector.shape_cast %5 : vector<128xf32> to vector<1x128xf32>
    %7 = vector.broadcast %6 : vector<1x128xf32> to vector<128x128xf32>
    %8 = arith.subf %4, %7 : vector<128x128xf32>
    %9 = math.exp %8 : vector<128x128xf32>
    %10 = tpu.iota {dimensions = array<i32: 0>} : vector<128x128xi32>
    %c16_i32 = arith.constant 16 : i32
    %11 = vector.broadcast %c16_i32 : i32 to vector<128x128xi32>
    %12 = arith.cmpi slt, %10, %11 : vector<128x128xi32>
    %cst_5 = arith.constant 0.000000e+00 : f32
    %13 = vector.broadcast %cst_5 : f32 to vector<128x128xf32>
    %14 = arith.select %12, %9, %13 : vector<128x128xi1>, vector<128x128xf32>
    %cst_6 = arith.constant dense<0.000000e+00> : vector<128xf32>
    %15 = vector.multi_reduction <add>, %14, %cst_6 [0] : vector<128x128xf32> to vector<128xf32>
    %16 = vector.shape_cast %15 : vector<128xf32> to vector<1x128xf32>
    %17 = tpu.reciprocal %16 : vector<1x128xf32> -> vector<1x128xf32>
    %18 = vector.broadcast %17 : vector<1x128xf32> to vector<128x128xf32>
    %19 = arith.mulf %14, %18 : vector<128x128xf32>
    %c0_7 = arith.constant 0 : index
    %c0_8 = arith.constant 0 : index
    %c0_9 = arith.constant 0 : index
    %20 = vector.load %arg4[%c0_7, %c0_8, %c0_9] : memref<2x128x128xf32, #tpu.memory_space<vmem>>, vector<1x128x128xf32>
    %21 = vector.shape_cast %20 : vector<1x128x128xf32> to vector<128x128xf32>
    %22 = vector.shape_cast %19 : vector<128x128xf32> to vector<1x128x128xf32>
    tpu.vector_store %arg4[%c0_7, %c0_8, %c0_9], %22 {strides = array<i32>} : memref<2x128x128xf32, #tpu.memory_space<vmem>>, vector<1x128x128xf32>,
    %23 = tpu.iota {dimensions = array<i32: 0>} : vector<128x128xi32>
    %24 = tpu.iota {dimensions = array<i32: 1>} : vector<128x128xi32>
    %c0_i32 = arith.constant 0 : i32
    %25 = vector.broadcast %c0_i32 : i32 to vector<128x128xi32>
    %26 = arith.addi %23, %25 : vector<128x128xi32>
    %27 = arith.cmpi eq, %26, %24 : vector<128x128xi32>
    %28 = arith.extui %27 : vector<128x128xi1> to vector<128x128xi32>
    %29 = arith.sitofp %28 : vector<128x128xi32> to vector<128x128xf32>
    %cst_10 = arith.constant dense<0.000000e+00> : vector<128x128xf32>
    %30 = tpu.matmul %19, %19, %cst_10 {dimension_numbers = #tpu.dot_dimension_numbers<[1], [0], [0], [1], [0, 0, 1, 1], [], []>} : vector<128x128xf32>, vector<128x128xf32>, vector<128x128xf32> -> vector<128x128xf32>
    %cst_11 = arith.constant 2.000000e+00 : f32
    %31 = vector.broadcast %cst_11 : f32 to vector<128x128xf32>
    %32 = arith.mulf %31, %30 : vector<128x128xf32>
    %33 = arith.subf %32, %29 : vector<128x128xf32>
    %c1 = arith.constant 1 : index
    %c0_12 = arith.constant 0 : index
    %c0_13 = arith.constant 0 : index
    %34 = vector.load %arg4[%c1, %c0_12, %c0_13] : memref<2x128x128xf32, #tpu.memory_space<vmem>>, vector<1x128x128xf32>
    %35 = vector.shape_cast %34 : vector<1x128x128xf32> to vector<128x128xf32>
    %36 = vector.shape_cast %33 : vector<128x128xf32> to vector<1x128x128xf32>
    tpu.vector_store %arg4[%c1, %c0_12, %c0_13], %36 {strides = array<i32>} : memref<2x128x128xf32, #tpu.memory_space<vmem>>, vector<1x128x128xf32>,
    %c0_14 = arith.constant 0 : index
    %c0_15 = arith.constant 0 : index
    %37 = vector.load %arg3[%c0_14, %c0_15] : memref<8x16xf32, #tpu.memory_space<vmem>>, vector<8x16xf32>
    %cst_16 = arith.constant dense<0.000000e+00> : vector<8x128xf32>
    %38 = tpu.matmul %37, %1, %cst_16 {dimension_numbers = #tpu.dot_dimension_numbers<[1], [0], [0], [1], [0, 0, 1, 1], [], []>} : vector<8x16xf32>, vector<16x128xf32>, vector<8x128xf32> -> vector<8x128xf32>
    %c0_17 = arith.constant 0 : index
    %c0_18 = arith.constant 0 : index
    %39 = vector.load %arg5[%c0_17, %c0_18] : memref<8x128xf32, #tpu.memory_space<vmem>>, vector<8x128xf32>
    tpu.vector_store %arg5[%c0_17, %c0_18], %38 {strides = array<i32>} : memref<8x128xf32, #tpu.memory_space<vmem>>, vector<8x128xf32>,
    return
  }
  func.func @transform_0(%arg0: i32) -> (i32, i32) {
    %c0_i32 = arith.constant 0 : i32
    %c0_i32_0 = arith.constant 0 : i32
    %c0_i32_1 = arith.constant 0 : i32
    return %c0_i32, %c0_i32_0 : i32, i32
  }
  func.func @transform_1(%arg0: i32) -> (i32, i32) {
    %c0_i32 = arith.constant 0 : i32
    %c0_i32_0 = arith.constant 0 : i32
    %c0_i32_1 = arith.constant 0 : i32
    return %c0_i32, %c0_i32_0 : i32, i32
  }
  func.func @transform_2(%arg0: i32) -> (i32, i32) {
    %c0_i32 = arith.constant 0 : i32
    %c0_i32_0 = arith.constant 0 : i32
    %c0_i32_1 = arith.constant 0 : i32
    return %c0_i32, %c0_i32_0 : i32, i32
  }
  func.func @transform_3(%arg0: i32) -> (i32, i32, i32) {
    %c0_i32 = arith.constant 0 : i32
    %c0_i32_0 = arith.constant 0 : i32
    %c0_i32_1 = arith.constant 0 : i32
    %c0_i32_2 = arith.constant 0 : i32
    return %c0_i32, %c0_i32_0, %c0_i32_1 : i32, i32, i32
  }
  func.func @transform_4(%arg0: i32) -> (i32, i32) {
    %c0_i32 = arith.constant 0 : i32
    %c0_i32_0 = arith.constant 0 : i32
    %c0_i32_1 = arith.constant 0 : i32
    return %c0_i32, %c0_i32_0 : i32, i32
  }
}

module attributes {stable_mosaic.version = 11 : i64} {
  func.func @_propagate_kernel(%arg0: i32, %arg1: memref<8x128xf32, #tpu.memory_space<vmem>>, %arg2: memref<2x128x128xf32, #tpu.memory_space<vmem>>, %arg3: memref<3x128x4xf32, #tpu.memory_space<vmem>>, %arg4: memref<16x128xf32, #tpu.memory_space<vmem>>, %arg5: memref<8x128xf32, #tpu.memory_space<vmem>>, %arg6: memref<2x8x128xf32, #tpu.memory_space<vmem>>) attributes {dimension_semantics = [#tpu.dimension_semantics<parallel>], iteration_bounds = array<i64: 1>, scalar_prefetch = 0 : i64, scratch_operands = 0 : i64, tpu.core_type = #tpu.core_type<tc>, window_params = [{transform_indices = @transform_0, window_bounds = array<i64: 8, 128>}, {pipeline_mode = #tpu.pipeline_mode<synchronous>, transform_indices = @transform_1, window_bounds = array<i64: 2, 128, 128>}, {pipeline_mode = #tpu.pipeline_mode<synchronous>, transform_indices = @transform_2, window_bounds = array<i64: 3, 128, 4>}, {pipeline_mode = #tpu.pipeline_mode<synchronous>, transform_indices = @transform_3, window_bounds = array<i64: 16, 128>}, {pipeline_mode = #tpu.pipeline_mode<synchronous>, transform_indices = @transform_4, window_bounds = array<i64: 8, 128>}, {transform_indices = @transform_5, window_bounds = array<i64: 2, 8, 128>}]} {
    %c0 = arith.constant 0 : index
    %c0_0 = arith.constant 0 : index
    %0 = vector.load %arg1[%c0, %c0_0] : memref<8x128xf32, #tpu.memory_space<vmem>>, vector<8x128xf32>
    %c0_1 = arith.constant 0 : index
    %c0_2 = arith.constant 0 : index
    %c0_3 = arith.constant 0 : index
    %1 = vector.load %arg2[%c0_1, %c0_2, %c0_3] : memref<2x128x128xf32, #tpu.memory_space<vmem>>, vector<1x128x128xf32>
    %2 = vector.shape_cast %1 : vector<1x128x128xf32> to vector<128x128xf32>
    %cst = arith.constant dense<0.000000e+00> : vector<8x128xf32>
    %3 = tpu.matmul %0, %2, %cst {dimension_numbers = #tpu.dot_dimension_numbers<[1], [0], [0], [1], [0, 0, 1, 1], [], []>} : vector<8x128xf32>, vector<128x128xf32>, vector<8x128xf32> -> vector<8x128xf32>
    %c1 = arith.constant 1 : index
    %c0_4 = arith.constant 0 : index
    %c0_5 = arith.constant 0 : index
    %4 = vector.load %arg2[%c1, %c0_4, %c0_5] : memref<2x128x128xf32, #tpu.memory_space<vmem>>, vector<1x128x128xf32>
    %5 = vector.shape_cast %4 : vector<1x128x128xf32> to vector<128x128xf32>
    %cst_6 = arith.constant dense<0.000000e+00> : vector<8x128xf32>
    %6 = tpu.matmul %0, %5, %cst_6 {dimension_numbers = #tpu.dot_dimension_numbers<[1], [0], [0], [1], [0, 0, 1, 1], [], []>} : vector<8x128xf32>, vector<128x128xf32>, vector<8x128xf32> -> vector<8x128xf32>
    %c0_7 = arith.constant 0 : index
    %c0_8 = arith.constant 0 : index
    %7 = vector.load %arg4[%c0_7, %c0_8] : memref<16x128xf32, #tpu.memory_space<vmem>>, vector<16x128xf32>
    %c0_9 = arith.constant 0 : index
    %c0_10 = arith.constant 0 : index
    %8 = vector.load %arg5[%c0_9, %c0_10] : memref<8x128xf32, #tpu.memory_space<vmem>>, vector<8x128xf32>
    %9 = vector.extract_strided_slice %0 {offsets = [0, 0], sizes = [4, 128], strides = [1, 1]} : vector<8x128xf32> to vector<4x128xf32>
    %c0_11 = arith.constant 0 : index
    %c0_12 = arith.constant 0 : index
    %c0_13 = arith.constant 0 : index
    %10 = vector.load %arg3[%c0_11, %c0_12, %c0_13] : memref<3x128x4xf32, #tpu.memory_space<vmem>>, vector<1x128x4xf32>
    %11 = vector.shape_cast %10 : vector<1x128x4xf32> to vector<128x4xf32>
    %cst_14 = arith.constant dense<0.000000e+00> : vector<128x128xf32>
    %12 = tpu.matmul %11, %9, %cst_14 {dimension_numbers = #tpu.dot_dimension_numbers<[1], [0], [0], [1], [0, 0, 1, 1], [], []>} : vector<128x4xf32>, vector<4x128xf32>, vector<128x128xf32> -> vector<128x128xf32>
    %13 = vector.extract_strided_slice %3 {offsets = [0, 0], sizes = [4, 128], strides = [1, 1]} : vector<8x128xf32> to vector<4x128xf32>
    %c1_15 = arith.constant 1 : index
    %c0_16 = arith.constant 0 : index
    %c0_17 = arith.constant 0 : index
    %14 = vector.load %arg3[%c1_15, %c0_16, %c0_17] : memref<3x128x4xf32, #tpu.memory_space<vmem>>, vector<1x128x4xf32>
    %15 = vector.shape_cast %14 : vector<1x128x4xf32> to vector<128x4xf32>
    %cst_18 = arith.constant dense<0.000000e+00> : vector<128x128xf32>
    %16 = tpu.matmul %15, %13, %cst_18 {dimension_numbers = #tpu.dot_dimension_numbers<[1], [0], [0], [1], [0, 0, 1, 1], [], []>} : vector<128x4xf32>, vector<4x128xf32>, vector<128x128xf32> -> vector<128x128xf32>
    %17 = arith.addf %12, %16 : vector<128x128xf32>
    %18 = vector.extract_strided_slice %6 {offsets = [0, 0], sizes = [4, 128], strides = [1, 1]} : vector<8x128xf32> to vector<4x128xf32>
    %c2 = arith.constant 2 : index
    %c0_19 = arith.constant 0 : index
    %c0_20 = arith.constant 0 : index
    %19 = vector.load %arg3[%c2, %c0_19, %c0_20] : memref<3x128x4xf32, #tpu.memory_space<vmem>>, vector<1x128x4xf32>
    %20 = vector.shape_cast %19 : vector<1x128x4xf32> to vector<128x4xf32>
    %cst_21 = arith.constant dense<0.000000e+00> : vector<128x128xf32>
    %21 = tpu.matmul %20, %18, %cst_21 {dimension_numbers = #tpu.dot_dimension_numbers<[1], [0], [0], [1], [0, 0, 1, 1], [], []>} : vector<128x4xf32>, vector<4x128xf32>, vector<128x128xf32> -> vector<128x128xf32>
    %22 = arith.addf %17, %21 : vector<128x128xf32>
    %23 = vector.shape_cast %22 : vector<128x128xf32> to vector<16x8x128xf32>
    %24 = vector.shape_cast %7 : vector<16x128xf32> to vector<16x1x128xf32>
    %25 = vector.broadcast %24 : vector<16x1x128xf32> to vector<16x8x128xf32>
    %26 = arith.mulf %23, %25 : vector<16x8x128xf32>
    %cst_22 = arith.constant dense<0.000000e+00> : vector<8x128xf32>
    %27 = vector.multi_reduction <add>, %26, %cst_22 [0] : vector<16x8x128xf32> to vector<8x128xf32>
    %28 = arith.addf %27, %8 : vector<8x128xf32>
    %c0_23 = arith.constant 0 : index
    %c0_24 = arith.constant 0 : index
    %c0_25 = arith.constant 0 : index
    %29 = vector.load %arg6[%c0_23, %c0_24, %c0_25] : memref<2x8x128xf32, #tpu.memory_space<vmem>>, vector<1x8x128xf32>
    %30 = vector.shape_cast %29 : vector<1x8x128xf32> to vector<8x128xf32>
    %31 = vector.shape_cast %28 : vector<8x128xf32> to vector<1x8x128xf32>
    tpu.vector_store %arg6[%c0_23, %c0_24, %c0_25], %31 {strides = array<i32>} : memref<2x8x128xf32, #tpu.memory_space<vmem>>, vector<1x8x128xf32>,
    %32 = vector.extract_strided_slice %0 {offsets = [4, 0], sizes = [4, 128], strides = [1, 1]} : vector<8x128xf32> to vector<4x128xf32>
    %c0_26 = arith.constant 0 : index
    %c0_27 = arith.constant 0 : index
    %c0_28 = arith.constant 0 : index
    %33 = vector.load %arg3[%c0_26, %c0_27, %c0_28] : memref<3x128x4xf32, #tpu.memory_space<vmem>>, vector<1x128x4xf32>
    %34 = vector.shape_cast %33 : vector<1x128x4xf32> to vector<128x4xf32>
    %cst_29 = arith.constant dense<0.000000e+00> : vector<128x128xf32>
    %35 = tpu.matmul %34, %32, %cst_29 {dimension_numbers = #tpu.dot_dimension_numbers<[1], [0], [0], [1], [0, 0, 1, 1], [], []>} : vector<128x4xf32>, vector<4x128xf32>, vector<128x128xf32> -> vector<128x128xf32>
    %36 = vector.extract_strided_slice %3 {offsets = [4, 0], sizes = [4, 128], strides = [1, 1]} : vector<8x128xf32> to vector<4x128xf32>
    %c1_30 = arith.constant 1 : index
    %c0_31 = arith.constant 0 : index
    %c0_32 = arith.constant 0 : index
    %37 = vector.load %arg3[%c1_30, %c0_31, %c0_32] : memref<3x128x4xf32, #tpu.memory_space<vmem>>, vector<1x128x4xf32>
    %38 = vector.shape_cast %37 : vector<1x128x4xf32> to vector<128x4xf32>
    %cst_33 = arith.constant dense<0.000000e+00> : vector<128x128xf32>
    %39 = tpu.matmul %38, %36, %cst_33 {dimension_numbers = #tpu.dot_dimension_numbers<[1], [0], [0], [1], [0, 0, 1, 1], [], []>} : vector<128x4xf32>, vector<4x128xf32>, vector<128x128xf32> -> vector<128x128xf32>
    %40 = arith.addf %35, %39 : vector<128x128xf32>
    %41 = vector.extract_strided_slice %6 {offsets = [4, 0], sizes = [4, 128], strides = [1, 1]} : vector<8x128xf32> to vector<4x128xf32>
    %c2_34 = arith.constant 2 : index
    %c0_35 = arith.constant 0 : index
    %c0_36 = arith.constant 0 : index
    %42 = vector.load %arg3[%c2_34, %c0_35, %c0_36] : memref<3x128x4xf32, #tpu.memory_space<vmem>>, vector<1x128x4xf32>
    %43 = vector.shape_cast %42 : vector<1x128x4xf32> to vector<128x4xf32>
    %cst_37 = arith.constant dense<0.000000e+00> : vector<128x128xf32>
    %44 = tpu.matmul %43, %41, %cst_37 {dimension_numbers = #tpu.dot_dimension_numbers<[1], [0], [0], [1], [0, 0, 1, 1], [], []>} : vector<128x4xf32>, vector<4x128xf32>, vector<128x128xf32> -> vector<128x128xf32>
    %45 = arith.addf %40, %44 : vector<128x128xf32>
    %46 = vector.shape_cast %45 : vector<128x128xf32> to vector<16x8x128xf32>
    %47 = vector.shape_cast %7 : vector<16x128xf32> to vector<16x1x128xf32>
    %48 = vector.broadcast %47 : vector<16x1x128xf32> to vector<16x8x128xf32>
    %49 = arith.mulf %46, %48 : vector<16x8x128xf32>
    %cst_38 = arith.constant dense<0.000000e+00> : vector<8x128xf32>
    %50 = vector.multi_reduction <add>, %49, %cst_38 [0] : vector<16x8x128xf32> to vector<8x128xf32>
    %51 = arith.addf %50, %8 : vector<8x128xf32>
    %c1_39 = arith.constant 1 : index
    %c0_40 = arith.constant 0 : index
    %c0_41 = arith.constant 0 : index
    %52 = vector.load %arg6[%c1_39, %c0_40, %c0_41] : memref<2x8x128xf32, #tpu.memory_space<vmem>>, vector<1x8x128xf32>
    %53 = vector.shape_cast %52 : vector<1x8x128xf32> to vector<8x128xf32>
    %54 = vector.shape_cast %51 : vector<8x128xf32> to vector<1x8x128xf32>
    tpu.vector_store %arg6[%c1_39, %c0_40, %c0_41], %54 {strides = array<i32>} : memref<2x8x128xf32, #tpu.memory_space<vmem>>, vector<1x8x128xf32>,
    return
  }
  func.func @transform_0(%arg0: i32) -> (i32, i32) {
    %c0_i32 = arith.constant 0 : i32
    %c0_i32_0 = arith.constant 0 : i32
    return %arg0, %c0_i32 : i32, i32
  }
  func.func @transform_1(%arg0: i32) -> (i32, i32, i32) {
    %c0_i32 = arith.constant 0 : i32
    %c0_i32_0 = arith.constant 0 : i32
    %c0_i32_1 = arith.constant 0 : i32
    %c0_i32_2 = arith.constant 0 : i32
    return %c0_i32, %c0_i32_0, %c0_i32_1 : i32, i32, i32
  }
  func.func @transform_2(%arg0: i32) -> (i32, i32, i32) {
    %c0_i32 = arith.constant 0 : i32
    %c0_i32_0 = arith.constant 0 : i32
    %c0_i32_1 = arith.constant 0 : i32
    %c0_i32_2 = arith.constant 0 : i32
    return %c0_i32, %c0_i32_0, %c0_i32_1 : i32, i32, i32
  }
  func.func @transform_3(%arg0: i32) -> (i32, i32) {
    %c0_i32 = arith.constant 0 : i32
    %c0_i32_0 = arith.constant 0 : i32
    %c0_i32_1 = arith.constant 0 : i32
    return %c0_i32, %c0_i32_0 : i32, i32
  }
  func.func @transform_4(%arg0: i32) -> (i32, i32) {
    %c0_i32 = arith.constant 0 : i32
    %c0_i32_0 = arith.constant 0 : i32
    %c0_i32_1 = arith.constant 0 : i32
    return %c0_i32, %c0_i32_0 : i32, i32
  }
  func.func @transform_5(%arg0: i32) -> (i32, i32, i32) {
    %c0_i32 = arith.constant 0 : i32
    %c0_i32_0 = arith.constant 0 : i32
    %c0_i32_1 = arith.constant 0 : i32
    return %arg0, %c0_i32, %c0_i32_0 : i32, i32, i32
  }
}

</mosaic_0001>

<llo_original>
// kernel: avwgcn_pallas.2
$region0: #{avwgcn_pallas.2}
  #allocation0 [shape = 'u32[]', space=smem, size = 0x4, offset = 0x4, fixed_abs, tag = 'smem constant byte address 0x4 - core index']
  #allocation1 [shape = 'u32[144,128]{1,0:T(1,128)}', space=vmem, size = 0x12000, scoped, tag = 'internal scratch']
  %s0 = inlined_call_operand.hbm [shape: f32[128,16], index: 0, kind: input, shape index: {}]
  %s1 = inlined_call_operand.hbm [shape: f32[16,128], index: 1, kind: input, shape index: {}]
  %s2 = inlined_call_operand.hbm [shape: f32[8,16], index: 2, kind: input, shape index: {}]
  %s3 = inlined_call_operand.hbm [shape: f32[2,128,128], index: 3, kind: output, shape index: {0}]
  %s4 = inlined_call_operand.hbm [shape: f32[8,128], index: 4, kind: output, shape index: {1}]
  %5 = xla_tuple %s3, %s4
  %s6 = sld [smem:[#allocation0]]
  $region42: #{avwgcn_pallas.2} parent=0
    _
  %s8 = ssub.s32 1, %s6
  %s9 = scalar_select 0, %s8, %s6
  $region1: #{avwgcn_pallas.2} parent=0
    #allocation2 [shape = 'u8[65536]{0}', space=vmem, size = 0x10000, scoped, tag = 'input window, operand 0, single buffered']
    #allocation3 [shape = 's32[1]{0}', space=sflag, size = 0x4, scoped, tag = 'scoped memory for avwgcn_pallas.2']
    #allocation4 [shape = 's32[1]{0}', space=sflag, size = 0x4, scoped, tag = 'scoped memory for avwgcn_pallas.2']
    #allocation5 [shape = 'u8[8192]{0}', space=vmem, size = 0x2000, scoped, tag = 'input window, operand 1, single buffered']
    #allocation6 [shape = 's32[1]{0}', space=sflag, size = 0x4, scoped, tag = 'scoped memory for avwgcn_pallas.2']
    #allocation7 [shape = 'u8[4096]{0}', space=vmem, size = 0x1000, scoped, tag = 'input window, operand 2, single buffered']
    #allocation8 [shape = 'u8[131072]{0}', space=vmem, size = 0x20000, scoped, tag = 'output window, operand 0, single buffered']
    #allocation9 [shape = 'u8[4096]{0}', space=vmem, size = 0x1000, scoped, tag = 'output window, operand 1, single buffered']
    #allocation10 [shape = 's32[1]{0}', space=sflag, size = 0x4, scoped, tag = 'scoped memory for avwgcn_pallas.2']
    %10 = vsyncpa [#allocation3], 0
    %11 = vsyncpa [#allocation6], 0
    %12 = vsyncpa [#allocation4], 0
    %13 = vsyncpa [#allocation10], 0
    // Predicated region
    $region2: #{avwgcn_pallas.2} parent=1 // pred_check
      _
    $region3: #{avwgcn_pallas.2} parent=1 // pred_check_branch
      %15 = sbr.rel (0) target = $region5
    $region4: #{avwgcn_pallas.2} parent=1 // pred_region
      %s17 = ssub.s32 2048, 2048
      %18 = vsyncadd [#allocation3], %s17
      %s19 = sshll.u32 [#allocation2], 4
      %s20 = int_to_ptr.vmem [resolvable:$true] %s19
      %25 = dma.hbm_to_vmem [thread:$0]  %s0, 2048, %s20, [#allocation3], 128, 128, 8
    $region5: #{avwgcn_pallas.2} parent=1 // pred_fallthru
      _
    // Predicated region
    $region6: #{avwgcn_pallas.2} parent=1 // pred_check
      _
    $region7: #{avwgcn_pallas.2} parent=1 // pred_check_branch
      %27 = sbr.rel (0) target = $region9
    $region8: #{avwgcn_pallas.2} parent=1 // pred_region
      %s29 = ssub.s32 256, 256
      %30 = vsyncadd [#allocation6], %s29
      %s31 = sshll.u32 [#allocation5], 4
      %s32 = int_to_ptr.vmem [resolvable:$true] %s31
      %37 = dma.hbm_to_vmem [thread:$0]  %s1, 256, %s32, [#allocation6], 128, 128, 8
    $region9: #{avwgcn_pallas.2} parent=1 // pred_fallthru
      _
    // Predicated region
    $region10: #{avwgcn_pallas.2} parent=1 // pred_check
      _
    $region11: #{avwgcn_pallas.2} parent=1 // pred_check_branch
      %39 = sbr.rel (0) target = $region13
    $region12: #{avwgcn_pallas.2} parent=1 // pred_region
      %s41 = ssub.s32 128, 128
      %42 = vsyncadd [#allocation6], %s41
      %s44 = sshll.u32 [#allocation7], 4
      %s45 = int_to_ptr.vmem [resolvable:$true] %s44
      %47 = dma.hbm_to_vmem [thread:$0]  %s2, 128, %s45, [#allocation6]
    $region13: #{avwgcn_pallas.2} parent=1 // pred_fallthru
      _
    // Predicated region
    $region14: #{avwgcn_pallas.2} parent=1 // pred_check
      _
    $region15: #{avwgcn_pallas.2} parent=1 // pred_check_branch
      %49 = sbr.rel (0) target = $region17
    $region16: #{avwgcn_pallas.2} parent=1 // pred_region
      %50 = dma.done [#allocation3], 2048
    $region17: #{avwgcn_pallas.2} parent=1 // pred_fallthru
      _
    // Predicated region
    $region18: #{avwgcn_pallas.2} parent=1 // pred_check
      _
    $region19: #{avwgcn_pallas.2} parent=1 // pred_check_branch
      %52 = sbr.rel (0) target = $region21
    $region20: #{avwgcn_pallas.2} parent=1 // pred_region
      %53 = dma.done [#allocation6], 256
    $region21: #{avwgcn_pallas.2} parent=1 // pred_fallthru
      _
    // Predicated region
    $region22: #{avwgcn_pallas.2} parent=1 // pred_check
      _
    $region23: #{avwgcn_pallas.2} parent=1 // pred_check_branch
      %55 = sbr.rel (0) target = $region25
    $region24: #{avwgcn_pallas.2} parent=1 // pred_region
      %56 = dma.done [#allocation6], 128
    $region25: #{avwgcn_pallas.2} parent=1 // pred_fallthru
      _
    %v57 = vld [vmem:[#allocation2] sm:$0xff]
    %v58 = vld [vmem:[#allocation2 + $0x8] sm:$0xff]
    %v59 = vld [vmem:[#allocation2 + $0x10] sm:$0xff]
    %v60 = vld [vmem:[#allocation2 + $0x18] sm:$0xff]
    %v61 = vld [vmem:[#allocation2 + $0x20] sm:$0xff]
    %v62 = vld [vmem:[#allocation2 + $0x28] sm:$0xff]
    %v63 = vld [vmem:[#allocation2 + $0x30] sm:$0xff]
    %v64 = vld [vmem:[#allocation2 + $0x38] sm:$0xff]
    %v65 = vld [vmem:[#allocation2 + $0x40] sm:$0xff]
    %v66 = vld [vmem:[#allocation2 + $0x48] sm:$0xff]
    %v67 = vld [vmem:[#allocation2 + $0x50] sm:$0xff]
    %v68 = vld [vmem:[#allocation2 + $0x58] sm:$0xff]
    %v69 = vld [vmem:[#allocation2 + $0x60] sm:$0xff]
    %v70 = vld [vmem:[#allocation2 + $0x68] sm:$0xff]
    %v71 = vld [vmem:[#allocation2 + $0x70] sm:$0xff]
    %v72 = vld [vmem:[#allocation2 + $0x78] sm:$0xff]
    %v73 = vld [vmem:[#allocation5] sm:$0xff]
    %v74 = vld [vmem:[#allocation5 + $0x8] sm:$0xff]
    %vm75 = vcmask 130048
    %v77 = vsel %vm75, %v57, 0
    %v80 = vsel %vm75, %v58, 0
    %v83 = vsel %vm75, %v59, 0
    %v86 = vsel %vm75, %v60, 0
    %v89 = vsel %vm75, %v61, 0
    %v92 = vsel %vm75, %v62, 0
    %v95 = vsel %vm75, %v63, 0
    %v98 = vsel %vm75, %v64, 0
    %v101 = vsel %vm75, %v65, 0
    %v104 = vsel %vm75, %v66, 0
    %v107 = vsel %vm75, %v67, 0
    %v110 = vsel %vm75, %v68, 0
    %v113 = vsel %vm75, %v69, 0
    %v116 = vsel %vm75, %v70, 0
    %v119 = vsel %vm75, %v71, 0
    %v122 = vsel %vm75, %v72, 0
    %124 = vmatprep.subr.mxu0 0.0
    %125 = vmatpush1.msra.mxu0 %v73
    %126 = vmatprep.subr.mxu0 0.0
    %127 = vmatpush1.msra.mxu0 %v74
    %128 = vmatprep.subr.mxu0 0.0
    %129 = vmatpush1.msra.mxu0 0.0
    %130 = vmatprep.subr.mxu0 0.0
    %131 = vmatpush1.msra.mxu0 0.0
    %132 = vmatprep.subr.mxu0 0.0
    %133 = vmatpush1.msra.mxu0 0.0
    %134 = vmatprep.subr.mxu0 0.0
    %135 = vmatpush1.msra.mxu0 0.0
    %136 = vmatprep.subr.mxu0 0.0
    %137 = vmatpush1.msra.mxu0 0.0
    %138 = vmatprep.subr.mxu0 0.0
    %139 = vmatpush1.msra.mxu0 0.0
    %140 = vmatprep.subr.mxu0 0.0
    %141 = vmatpush1.msra.mxu0 0.0
    %142 = vmatprep.subr.mxu0 0.0
    %143 = vmatpush1.msra.mxu0 0.0
    %144 = vmatprep.subr.mxu0 0.0
    %145 = vmatpush1.msra.mxu0 0.0
    %146 = vmatprep.subr.mxu0 0.0
    %147 = vmatpush1.msra.mxu0 0.0
    %148 = vmatprep.subr.mxu0 0.0
    %149 = vmatpush1.msra.mxu0 0.0
    %150 = vmatprep.subr.mxu0 0.0
    %151 = vmatpush1.msra.mxu0 0.0
    %152 = vmatprep.subr.mxu0 0.0
    %153 = vmatpush1.msra.mxu0 0.0
    %154 = vmatprep.subr.mxu0 0.0
    %155 = vmatpush1.msra.mxu0 0.0
    %156 = vmatprep.subr.mxu0 0.0
    %157 = vmatpush1.msra.mxu0 0.0
    %158 = vmatprep.subr.mxu0 0.0
    %159 = vmatpush1.msra.mxu0 0.0
    %160 = vmatprep.subr.mxu0 0.0
    %161 = vmatpush1.msra.mxu0 0.0
    %162 = vmatprep.subr.mxu0 0.0
    %163 = vmatpush1.msra.mxu0 0.0
    %164 = vmatprep.subr.mxu0 0.0
    %165 = vmatpush1.msra.mxu0 0.0
    %166 = vmatprep.subr.mxu0 0.0
    %167 = vmatpush1.msra.mxu0 0.0
    %168 = vmatprep.subr.mxu0 0.0
    %169 = vmatpush1.msra.mxu0 0.0
    %170 = vmatprep.subr.mxu0 0.0
    %171 = vmatpush1.msra.mxu0 0.0
    %172 = vmatprep.subr.mxu0 0.0
    %173 = vmatpush1.msra.mxu0 0.0
    %174 = vmatprep.subr.mxu0 0.0
    %175 = vmatpush1.msra.mxu0 0.0
    %176 = vmatprep.subr.mxu0 0.0
    %177 = vmatpush1.msra.mxu0 0.0
    %178 = vmatprep.subr.mxu0 0.0
    %179 = vmatpush1.msra.mxu0 0.0
    %180 = vmatprep.subr.mxu0 0.0
    %181 = vmatpush1.msra.mxu0 0.0
    %182 = vmatprep.subr.mxu0 0.0
    %183 = vmatpush1.msra.mxu0 0.0
    %184 = vmatprep.subr.mxu0 0.0
    %185 = vmatpush1.msra.mxu0 0.0
    %186 = vmatprep.subr.mxu0 0.0
    %187 = vmatpush1.msra.mxu0 0.0
    %188 = vmatprep.mubr.f32.mxu0 0.0
    %189 = vmatmul.mubr.f32.gmra.mrb[0].mxu0 %v77
    %v190 = vpop.f32.mrb[0].mxu0
    %v191 = vadd.f32 0.0, %v190
    %v192 = vpop.f32.mrb[0].mxu0
    %193 = vmatprep.mubr.f32.mxu0 0.0
    %194 = vmatmul.mubr.f32.gmra.mrb[0].mxu0 %v80
    %v195 = vpop.f32.mrb[0].mxu0
    %v196 = vadd.f32 0.0, %v195
    %v197 = vpop.f32.mrb[0].mxu0
    %198 = vmatprep.mubr.f32.mxu0 0.0
    %199 = vmatmul.mubr.f32.gmra.mrb[0].mxu0 %v83
    %v200 = vpop.f32.mrb[0].mxu0
    %v201 = vadd.f32 0.0, %v200
    %v202 = vpop.f32.mrb[0].mxu0
    %203 = vmatprep.mubr.f32.mxu0 0.0
    %204 = vmatmul.mubr.f32.gmra.mrb[0].mxu0 %v86
    %v205 = vpop.f32.mrb[0].mxu0
    %v206 = vadd.f32 0.0, %v205
    %v207 = vpop.f32.mrb[0].mxu0
    %208 = vmatprep.mubr.f32.mxu0 0.0
    %209 = vmatmul.mubr.f32.gmra.mrb[0].mxu0 %v89
    %v210 = vpop.f32.mrb[0].mxu0
    %v211 = vadd.f32 0.0, %v210
    %v212 = vpop.f32.mrb[0].mxu0
    %213 = vmatprep.mubr.f32.mxu0 0.0
    %214 = vmatmul.mubr.f32.gmra.mrb[0].mxu0 %v92
    %v215 = vpop.f32.mrb[0].mxu0
    %v216 = vadd.f32 0.0, %v215
    %v217 = vpop.f32.mrb[0].mxu0
    %218 = vmatprep.mubr.f32.mxu0 0.0
    %219 = vmatmul.mubr.f32.gmra.mrb[0].mxu0 %v95
    %v220 = vpop.f32.mrb[0].mxu0
    %v221 = vadd.f32 0.0, %v220
    %v222 = vpop.f32.mrb[0].mxu0
    %223 = vmatprep.mubr.f32.mxu0 0.0
    %224 = vmatmul.mubr.f32.gmra.mrb[0].mxu0 %v98
    %v225 = vpop.f32.mrb[0].mxu0
    %v226 = vadd.f32 0.0, %v225
    %v227 = vpop.f32.mrb[0].mxu0
    %228 = vmatprep.mubr.f32.mxu0 0.0
    %229 = vmatmul.mubr.f32.gmra.mrb[0].mxu0 %v101
    %v230 = vpop.f32.mrb[0].mxu0
    %v231 = vadd.f32 0.0, %v230
    %v232 = vpop.f32.mrb[0].mxu0
    %233 = vmatprep.mubr.f32.mxu0 0.0
    %234 = vmatmul.mubr.f32.gmra.mrb[0].mxu0 %v104
    %v235 = vpop.f32.mrb[0].mxu0
    %v236 = vadd.f32 0.0, %v235
    %v237 = vpop.f32.mrb[0].mxu0
    %238 = vmatprep.mubr.f32.mxu0 0.0
    %239 = vmatmul.mubr.f32.gmra.mrb[0].mxu0 %v107
    %v240 = vpop.f32.mrb[0].mxu0
    %v241 = vadd.f32 0.0, %v240
    %v242 = vpop.f32.mrb[0].mxu0
    %243 = vmatprep.mubr.f32.mxu0 0.0
    %244 = vmatmul.mubr.f32.gmra.mrb[0].mxu0 %v110
    %v245 = vpop.f32.mrb[0].mxu0
    %v246 = vadd.f32 0.0, %v245
    %v247 = vpop.f32.mrb[0].mxu0
    %248 = vmatprep.mubr.f32.mxu0 0.0
    %249 = vmatmul.mubr.f32.gmra.mrb[0].mxu0 %v113
    %v250 = vpop.f32.mrb[0].mxu0
    %v251 = vadd.f32 0.0, %v250
    %v252 = vpop.f32.mrb[0].mxu0
    %253 = vmatprep.mubr.f32.mxu0 0.0
    %254 = vmatmul.mubr.f32.gmra.mrb[0].mxu0 %v116
    %v255 = vpop.f32.mrb[0].mxu0
    %v256 = vadd.f32 0.0, %v255
    %v257 = vpop.f32.mrb[0].mxu0
    %258 = vmatprep.mubr.f32.mxu0 0.0
    %259 = vmatmul.mubr.f32.gmra.mrb[0].mxu0 %v119
    %v260 = vpop.f32.mrb[0].mxu0
    %v261 = vadd.f32 0.0, %v260
    %v262 = vpop.f32.mrb[0].mxu0
    %263 = vmatprep.mubr.f32.mxu0 0.0
    %264 = vmatmul.mubr.f32.gmra.mrb[0].mxu0 %v122
    %v265 = vpop.f32.mrb[0].mxu0
    %v266 = vadd.f32 0.0, %v265
    %v267 = vpop.f32.mrb[0].mxu0
    %268 = vdwg.mxu0
    %v269 = vmax.f32 %v191, 0.0
    %v270 = vmax.f32 %v196, 0.0
    %v271 = vmax.f32 %v201, 0.0
    %v272 = vmax.f32 %v206, 0.0
    %v273 = vmax.f32 %v211, 0.0
    %v274 = vmax.f32 %v216, 0.0
    %v275 = vmax.f32 %v221, 0.0
    %v276 = vmax.f32 %v226, 0.0
    %v277 = vmax.f32 %v231, 0.0
    %v278 = vmax.f32 %v236, 0.0
    %v279 = vmax.f32 %v241, 0.0
    %v280 = vmax.f32 %v246, 0.0
    %v281 = vmax.f32 %v251, 0.0
    %v282 = vmax.f32 %v256, 0.0
    %v283 = vmax.f32 %v261, 0.0
    %v284 = vmax.f32 %v266, 0.0
    %v285 = vmax.f32 %v269, %v273
    %v286 = vmax.f32 %v270, %v274
    %v287 = vmax.f32 %v271, %v275
    %v288 = vmax.f32 %v272, %v276
    %v289 = vmax.f32 %v285, %v277
    %v290 = vmax.f32 %v286, %v278
    %v291 = vmax.f32 %v287, %v279
    %v292 = vmax.f32 %v288, %v280
    %v293 = vmax.f32 %v289, %v281
    %v294 = vmax.f32 %v290, %v282
    %v295 = vmax.f32 %v291, %v283
    %v296 = vmax.f32 %v292, %v284
    %v297 = vmax.f32 %v293, %v294
    %v298 = vmax.f32 %v295, %v296
    %v299 = vmax.f32 %v297, %v298
    %v300 = vrot.slane %v299, 4
    %v301 = vmax.f32 %v299, %v300
    %v302 = vrot.slane %v301, 2
    %v303 = vmax.f32 %v301, %v302
    %v304 = vrot.slane %v303, 1
    %v305 = vmax.f32 %v303, %v304
    %v306 = vsub.f32 %v269, %v305
    %v307 = vsub.f32 %v270, %v305
    %v308 = vsub.f32 %v271, %v305
    %v309 = vsub.f32 %v272, %v305
    %v310 = vsub.f32 %v273, %v305
    %v311 = vsub.f32 %v274, %v305
    %v312 = vsub.f32 %v275, %v305
    %v313 = vsub.f32 %v276, %v305
    %v314 = vsub.f32 %v277, %v305
    %v315 = vsub.f32 %v278, %v305
    %v316 = vsub.f32 %v279, %v305
    %v317 = vsub.f32 %v280, %v305
    %v318 = vsub.f32 %v281, %v305
    %v319 = vsub.f32 %v282, %v305
    %v320 = vsub.f32 %v283, %v305
    %v321 = vsub.f32 %v284, %v305
    %v322 = vmul.f32 %v306, 1.442695
    %v323 = vpow.pop %v322
    %v324 = vmul.f32 %v307, 1.442695
    %v325 = vpow.pop %v324
    %v326 = vmul.f32 %v308, 1.442695
    %v327 = vpow.pop %v326
    %v328 = vmul.f32 %v309, 1.442695
    %v329 = vpow.pop %v328
    %v330 = vmul.f32 %v310, 1.442695
    %v331 = vpow.pop %v330
    %v332 = vmul.f32 %v311, 1.442695
    %v333 = vpow.pop %v332
    %v334 = vmul.f32 %v312, 1.442695
    %v335 = vpow.pop %v334
    %v336 = vmul.f32 %v313, 1.442695
    %v337 = vpow.pop %v336
    %v338 = vmul.f32 %v314, 1.442695
    %v339 = vpow.pop %v338
    %v340 = vmul.f32 %v315, 1.442695
    %v341 = vpow.pop %v340
    %v342 = vmul.f32 %v316, 1.442695
    %v343 = vpow.pop %v342
    %v344 = vmul.f32 %v317, 1.442695
    %v345 = vpow.pop %v344
    %v346 = vmul.f32 %v318, 1.442695
    %v347 = vpow.pop %v346
    %v348 = vmul.f32 %v319, 1.442695
    %v349 = vpow.pop %v348
    %v350 = vmul.f32 %v320, 1.442695
    %v351 = vpow.pop %v350
    %v352 = vmul.f32 %v321, 1.442695
    %v353 = vpow.pop %v352
    %v354 = vlaneseq
    %v355 = vshrl.u32 %v354, 7
    %v356 = vadd.s32 %v355, 8
    %v357 = vadd.s32 %v355, 16
    %v358 = vadd.s32 %v355, 24
    %v359 = vadd.s32 %v355, 32
    %v360 = vadd.s32 %v355, 40
    %v361 = vadd.s32 %v355, 48
    %v362 = vadd.s32 %v355, 56
    %v363 = vadd.s32 %v355, 64
    %v364 = vadd.s32 %v355, 72
    %v365 = vadd.s32 %v355, 80
    %v366 = vadd.s32 %v355, 88
    %v367 = vadd.s32 %v355, 96
    %v368 = vadd.s32 %v355, 104
    %v369 = vadd.s32 %v355, 112
    %v370 = vadd.s32 %v355, 120
    %vm371 = vcmp.lt.s32.totalorder %v355, 16
    %vm372 = vcmp.lt.s32.totalorder %v356, 16
    %vm373 = vcmp.lt.s32.totalorder %v357, 16
    %vm374 = vcmp.lt.s32.totalorder %v358, 16
    %vm375 = vcmp.lt.s32.totalorder %v359, 16
    %vm376 = vcmp.lt.s32.totalorder %v360, 16
    %vm377 = vcmp.lt.s32.totalorder %v361, 16
    %vm378 = vcmp.lt.s32.totalorder %v362, 16
    %vm379 = vcmp.lt.s32.totalorder %v363, 16
    %vm380 = vcmp.lt.s32.totalorder %v364, 16
    %vm381 = vcmp.lt.s32.totalorder %v365, 16
    %vm382 = vcmp.lt.s32.totalorder %v366, 16
    %vm383 = vcmp.lt.s32.totalorder %v367, 16
    %vm384 = vcmp.lt.s32.totalorder %v368, 16
    %vm385 = vcmp.lt.s32.totalorder %v369, 16
    %vm386 = vcmp.lt.s32.totalorder %v370, 16
    %v387 = vsel %vm371, %v323, 0.0
    %v388 = vsel %vm372, %v325, 0.0
    %v389 = vsel %vm373, %v327, 0.0
    %v390 = vsel %vm374, %v329, 0.0
    %v391 = vsel %vm375, %v331, 0.0
    %v392 = vsel %vm376, %v333, 0.0
    %v393 = vsel %vm377, %v335, 0.0
    %v394 = vsel %vm378, %v337, 0.0
    %v395 = vsel %vm379, %v339, 0.0
    %v396 = vsel %vm380, %v341, 0.0
    %v397 = vsel %vm381, %v343, 0.0
    %v398 = vsel %vm382, %v345, 0.0
    %v399 = vsel %vm383, %v347, 0.0
    %v400 = vsel %vm384, %v349, 0.0
    %v401 = vsel %vm385, %v351, 0.0
    %v402 = vsel %vm386, %v353, 0.0
    %v403 = vadd.f32 %v387, %v388
    %v404 = vadd.f32 %v403, %v389
    %v405 = vadd.f32 %v404, %v390
    %v406 = vadd.f32 %v405, %v391
    %v407 = vadd.f32 %v406, %v392
    %v408 = vadd.f32 %v407, %v393
    %v409 = vadd.f32 %v408, %v394
    %v410 = vadd.f32 %v409, %v395
    %v411 = vadd.f32 %v410, %v396
    %v412 = vadd.f32 %v411, %v397
    %v413 = vadd.f32 %v412, %v398
    %v414 = vadd.f32 %v413, %v399
    %v415 = vadd.f32 %v414, %v400
    %v416 = vadd.f32 %v415, %v401
    %v417 = vadd.f32 %v416, %v402
    %v418 = vrot.slane %v417, 4
    %v419 = vadd.f32 %v417, %v418
    %v420 = vrot.slane %v419, 2
    %v421 = vadd.f32 %v419, %v420
    %v422 = vrot.slane %v421, 1
    %v423 = vadd.f32 %v421, %v422
    %v424 = vrcp.pop %v423
    %v425 = vmul.f32 %v387, %v424
    %v426 = vmul.f32 %v388, %v424
    %v427 = vmul.f32 %v389, %v424
    %v428 = vmul.f32 %v390, %v424
    %v429 = vmul.f32 %v391, %v424
    %v430 = vmul.f32 %v392, %v424
    %v431 = vmul.f32 %v393, %v424
    %v432 = vmul.f32 %v394, %v424
    %v433 = vmul.f32 %v395, %v424
    %v434 = vmul.f32 %v396, %v424
    %v435 = vmul.f32 %v397, %v424
    %v436 = vmul.f32 %v398, %v424
    %v437 = vmul.f32 %v399, %v424
    %v438 = vmul.f32 %v400, %v424
    %v439 = vmul.f32 %v401, %v424
    %v440 = vmul.f32 %v402, %v424
    %441 = vst [vmem:[#allocation8] sm:$0xff] %v425
    %442 = vst [vmem:[#allocation8 + $0x8] sm:$0xff] %v426
    %443 = vst [vmem:[#allocation8 + $0x10] sm:$0xff] %v427
    %444 = vst [vmem:[#allocation8 + $0x18] sm:$0xff] %v428
    %445 = vst [vmem:[#allocation8 + $0x20] sm:$0xff] %v429
    %446 = vst [vmem:[#allocation8 + $0x28] sm:$0xff] %v430
    %447 = vst [vmem:[#allocation8 + $0x30] sm:$0xff] %v431
    %448 = vst [vmem:[#allocation8 + $0x38] sm:$0xff] %v432
    %449 = vst [vmem:[#allocation8 + $0x40] sm:$0xff] %v433
    %450 = vst [vmem:[#allocation8 + $0x48] sm:$0xff] %v434
    %451 = vst [vmem:[#allocation8 + $0x50] sm:$0xff] %v435
    %452 = vst [vmem:[#allocation8 + $0x58] sm:$0xff] %v436
    %453 = vst [vmem:[#allocation8 + $0x60] sm:$0xff] %v437
    %454 = vst [vmem:[#allocation8 + $0x68] sm:$0xff] %v438
    %455 = vst [vmem:[#allocation8 + $0x70] sm:$0xff] %v439
    %456 = vst [vmem:[#allocation8 + $0x78] sm:$0xff] %v440
    %v457 = vlaneseq
    %v458 = vand.u32 %v457, 127
    %vm459 = vcmp.eq.s32.totalorder %v355, %v458
    %vm460 = vcmp.eq.s32.totalorder %v356, %v458
    %vm461 = vcmp.eq.s32.totalorder %v357, %v458
    %vm462 = vcmp.eq.s32.totalorder %v358, %v458
    %vm463 = vcmp.eq.s32.totalorder %v359, %v458
    %vm464 = vcmp.eq.s32.totalorder %v360, %v458
    %vm465 = vcmp.eq.s32.totalorder %v361, %v458
    %vm466 = vcmp.eq.s32.totalorder %v362, %v458
    %vm467 = vcmp.eq.s32.totalorder %v363, %v458
    %vm468 = vcmp.eq.s32.totalorder %v364, %v458
    %vm469 = vcmp.eq.s32.totalorder %v365, %v458
    %vm470 = vcmp.eq.s32.totalorder %v366, %v458
    %vm471 = vcmp.eq.s32.totalorder %v367, %v458
    %vm472 = vcmp.eq.s32.totalorder %v368, %v458
    %vm473 = vcmp.eq.s32.totalorder %v369, %v458
    %vm474 = vcmp.eq.s32.totalorder %v370, %v458
    %v475 = vsel %vm459, 1, 0
    %v476 = vsel %vm460, 1, 0
    %v477 = vsel %vm461, 1, 0
    %v478 = vsel %vm462, 1, 0
    %v479 = vsel %vm463, 1, 0
    %v480 = vsel %vm464, 1, 0
    %v481 = vsel %vm465, 1, 0
    %v482 = vsel %vm466, 1, 0
    %v483 = vsel %vm467, 1, 0
    %v484 = vsel %vm468, 1, 0
    %v485 = vsel %vm469, 1, 0
    %v486 = vsel %vm470, 1, 0
    %v487 = vsel %vm471, 1, 0
    %v488 = vsel %vm472, 1, 0
    %v489 = vsel %vm473, 1, 0
    %v490 = vsel %vm474, 1, 0
    %v491 = vcvt.s32.f32 %v475
    %v492 = vcvt.s32.f32 %v476
    %v493 = vcvt.s32.f32 %v477
    %v494 = vcvt.s32.f32 %v478
    %v495 = vcvt.s32.f32 %v479
    %v496 = vcvt.s32.f32 %v480
    %v497 = vcvt.s32.f32 %v481
    %v498 = vcvt.s32.f32 %v482
    %v499 = vcvt.s32.f32 %v483
    %v500 = vcvt.s32.f32 %v484
    %v501 = vcvt.s32.f32 %v485
    %v502 = vcvt.s32.f32 %v486
    %v503 = vcvt.s32.f32 %v487
    %v504 = vcvt.s32.f32 %v488
    %v505 = vcvt.s32.f32 %v489
    %v506 = vcvt.s32.f32 %v490
    %507 = vmatprep.subr.mxu0 0.0
    %508 = vmatpush1.msra.mxu0 %v425
    %509 = vmatprep.subr.mxu0 0.0
    %510 = vmatpush1.msra.mxu0 %v426
    %511 = vmatprep.subr.mxu0 0.0
    %512 = vmatpush1.msra.mxu0 %v427
    %513 = vmatprep.subr.mxu0 0.0
    %514 = vmatpush1.msra.mxu0 %v428
    %515 = vmatprep.subr.mxu0 0.0
    %516 = vmatpush1.msra.mxu0 %v429
    %517 = vmatprep.subr.mxu0 0.0
    %518 = vmatpush1.msra.mxu0 %v430
    %519 = vmatprep.subr.mxu0 0.0
    %520 = vmatpush1.msra.mxu0 %v431
    %521 = vmatprep.subr.mxu0 0.0
    %522 = vmatpush1.msra.mxu0 %v432
    %523 = vmatprep.subr.mxu0 0.0
    %524 = vmatpush1.msra.mxu0 %v433
    %525 = vmatprep.subr.mxu0 0.0
    %526 = vmatpush1.msra.mxu0 %v434
    %527 = vmatprep.subr.mxu0 0.0
    %528 = vmatpush1.msra.mxu0 %v435
    %529 = vmatprep.subr.mxu0 0.0
    %530 = vmatpush1.msra.mxu0 %v436
    %531 = vmatprep.subr.mxu0 0.0
    %532 = vmatpush1.msra.mxu0 %v437
    %533 = vmatprep.subr.mxu0 0.0
    %534 = vmatpush1.msra.mxu0 %v438
    %535 = vmatprep.subr.mxu0 0.0
    %536 = vmatpush1.msra.mxu0 %v439
    %537 = vmatprep.subr.mxu0 0.0
    %538 = vmatpush1.msra.mxu0 %v440
    %539 = vmatprep.subr.mxu0 0.0
    %540 = vmatpush1.msra.mxu0 0.0
    %541 = vmatprep.subr.mxu0 0.0
    %542 = vmatpush1.msra.mxu0 0.0
    %543 = vmatprep.subr.mxu0 0.0
    %544 = vmatpush1.msra.mxu0 0.0
    %545 = vmatprep.subr.mxu0 0.0
    %546 = vmatpush1.msra.mxu0 0.0
    %547 = vmatprep.subr.mxu0 0.0
    %548 = vmatpush1.msra.mxu0 0.0
    %549 = vmatprep.subr.mxu0 0.0
    %550 = vmatpush1.msra.mxu0 0.0
    %551 = vmatprep.subr.mxu0 0.0
    %552 = vmatpush1.msra.mxu0 0.0
    %553 = vmatprep.subr.mxu0 0.0
    %554 = vmatpush1.msra.mxu0 0.0
    %555 = vmatprep.subr.mxu0 0.0
    %556 = vmatpush1.msra.mxu0 0.0
    %557 = vmatprep.subr.mxu0 0.0
    %558 = vmatpush1.msra.mxu0 0.0
    %559 = vmatprep.subr.mxu0 0.0
    %560 = vmatpush1.msra.mxu0 0.0
    %561 = vmatprep.subr.mxu0 0.0
    %562 = vmatpush1.msra.mxu0 0.0
    %563 = vmatprep.subr.mxu0 0.0
    %564 = vmatpush1.msra.mxu0 0.0
    %565 = vmatprep.subr.mxu0 0.0
    %566 = vmatpush1.msra.mxu0 0.0
    %567 = vmatprep.subr.mxu0 0.0
    %568 = vmatpush1.msra.mxu0 0.0
    %569 = vmatprep.subr.mxu0 0.0
    %570 = vmatpush1.msra.mxu0 0.0
    %571 = vmatprep.mubr.f32.mxu0 0.0
    %572 = vmatmul.mubr.f32.gmra.mrb[0].mxu0 %v425
    %v573 = vpop.f32.mrb[0].mxu0
    %v574 = vadd.f32 0.0, %v573
    %v575 = vpop.f32.mrb[0].mxu0
    %576 = vmatprep.mubr.f32.mxu0 0.0
    %577 = vmatmul.mubr.f32.gmra.mrb[0].mxu0 %v426
    %v578 = vpop.f32.mrb[0].mxu0
    %v579 = vadd.f32 0.0, %v578
    %v580 = vpop.f32.mrb[0].mxu0
    %581 = vmatprep.mubr.f32.mxu0 0.0
    %582 = vmatmul.mubr.f32.gmra.mrb[0].mxu0 %v427
    %v583 = vpop.f32.mrb[0].mxu0
    %v584 = vadd.f32 0.0, %v583
    %v585 = vpop.f32.mrb[0].mxu0
    %586 = vmatprep.mubr.f32.mxu0 0.0
    %587 = vmatmul.mubr.f32.gmra.mrb[0].mxu0 %v428
    %v588 = vpop.f32.mrb[0].mxu0
    %v589 = vadd.f32 0.0, %v588
    %v590 = vpop.f32.mrb[0].mxu0
    %591 = vmatprep.mubr.f32.mxu0 0.0
    %592 = vmatmul.mubr.f32.gmra.mrb[0].mxu0 %v429
    %v593 = vpop.f32.mrb[0].mxu0
    %v594 = vadd.f32 0.0, %v593
    %v595 = vpop.f32.mrb[0].mxu0
    %596 = vmatprep.mubr.f32.mxu0 0.0
    %597 = vmatmul.mubr.f32.gmra.mrb[0].mxu0 %v430
    %v598 = vpop.f32.mrb[0].mxu0
    %v599 = vadd.f32 0.0, %v598
    %v600 = vpop.f32.mrb[0].mxu0
    %601 = vmatprep.mubr.f32.mxu0 0.0
    %602 = vmatmul.mubr.f32.gmra.mrb[0].mxu0 %v431
    %v603 = vpop.f32.mrb[0].mxu0
    %v604 = vadd.f32 0.0, %v603
    %v605 = vpop.f32.mrb[0].mxu0
    %606 = vmatprep.mubr.f32.mxu0 0.0
    %607 = vmatmul.mubr.f32.gmra.mrb[0].mxu0 %v432
    %v608 = vpop.f32.mrb[0].mxu0
    %v609 = vadd.f32 0.0, %v608
    %v610 = vpop.f32.mrb[0].mxu0
    %611 = vmatprep.mubr.f32.mxu0 0.0
    %612 = vmatmul.mubr.f32.gmra.mrb[0].mxu0 %v433
    %v613 = vpop.f32.mrb[0].mxu0
    %v614 = vadd.f32 0.0, %v613
    %v615 = vpop.f32.mrb[0].mxu0
    %616 = vmatprep.mubr.f32.mxu0 0.0
    %617 = vmatmul.mubr.f32.gmra.mrb[0].mxu0 %v434
    %v618 = vpop.f32.mrb[0].mxu0
    %v619 = vadd.f32 0.0, %v618
    %v620 = vpop.f32.mrb[0].mxu0
    %621 = vmatprep.mubr.f32.mxu0 0.0
    %622 = vmatmul.mubr.f32.gmra.mrb[0].mxu0 %v435
    %v623 = vpop.f32.mrb[0].mxu0
    %v624 = vadd.f32 0.0, %v623
    %v625 = vpop.f32.mrb[0].mxu0
    %626 = vmatprep.mubr.f32.mxu0 0.0
    %627 = vmatmul.mubr.f32.gmra.mrb[0].mxu0 %v436
    %v628 = vpop.f32.mrb[0].mxu0
    %v629 = vadd.f32 0.0, %v628
    %v630 = vpop.f32.mrb[0].mxu0
    %631 = vmatprep.mubr.f32.mxu0 0.0
    %632 = vmatmul.mubr.f32.gmra.mrb[0].mxu0 %v437
    %v633 = vpop.f32.mrb[0].mxu0
    %v634 = vadd.f32 0.0, %v633
    %v635 = vpop.f32.mrb[0].mxu0
    %636 = vmatprep.mubr.f32.mxu0 0.0
    %637 = vmatmul.mubr.f32.gmra.mrb[0].mxu0 %v438
    %v638 = vpop.f32.mrb[0].mxu0
    %v639 = vadd.f32 0.0, %v638
    %v640 = vpop.f32.mrb[0].mxu0
    %641 = vmatprep.mubr.f32.mxu0 0.0
    %642 = vmatmul.mubr.f32.gmra.mrb[0].mxu0 %v439
    %v643 = vpop.f32.mrb[0].mxu0
    %v644 = vadd.f32 0.0, %v643
    %v645 = vpop.f32.mrb[0].mxu0
    %646 = vmatprep.mubr.f32.mxu0 0.0
    %647 = vmatmul.mubr.f32.gmra.mrb[0].mxu0 %v440
    %v648 = vpop.f32.mrb[0].mxu0
    %v649 = vadd.f32 0.0, %v648
    %v650 = vpop.f32.mrb[0].mxu0
    %651 = vdwg.mxu0
    %v652 = vmul.f32 %v574, 2.0
    %v653 = vmul.f32 %v579, 2.0
    %v654 = vmul.f32 %v584, 2.0
    %v655 = vmul.f32 %v589, 2.0
    %v656 = vmul.f32 %v594, 2.0
    %v657 = vmul.f32 %v599, 2.0
    %v658 = vmul.f32 %v604, 2.0
    %v659 = vmul.f32 %v609, 2.0
    %v660 = vmul.f32 %v614, 2.0
    %v661 = vmul.f32 %v619, 2.0
    %v662 = vmul.f32 %v624, 2.0
    %v663 = vmul.f32 %v629, 2.0
    %v664 = vmul.f32 %v634, 2.0
    %v665 = vmul.f32 %v639, 2.0
    %v666 = vmul.f32 %v644, 2.0
    %v667 = vmul.f32 %v649, 2.0
    %v668 = vsub.f32 %v652, %v491
    %v669 = vsub.f32 %v653, %v492
    %v670 = vsub.f32 %v654, %v493
    %v671 = vsub.f32 %v655, %v494
    %v672 = vsub.f32 %v656, %v495
    %v673 = vsub.f32 %v657, %v496
    %v674 = vsub.f32 %v658, %v497
    %v675 = vsub.f32 %v659, %v498
    %v676 = vsub.f32 %v660, %v499
    %v677 = vsub.f32 %v661, %v500
    %v678 = vsub.f32 %v662, %v501
    %v679 = vsub.f32 %v663, %v502
    %v680 = vsub.f32 %v664, %v503
    %v681 = vsub.f32 %v665, %v504
    %v682 = vsub.f32 %v666, %v505
    %v683 = vsub.f32 %v667, %v506
    %s684 = scalar_lea.vmem [#allocation8], 128
    %685 = vst [vmem:[%s684] sm:$0xff] %v668
    %686 = vst [vmem:[%s684 + $0x8] sm:$0xff] %v669
    %687 = vst [vmem:[%s684 + $0x10] sm:$0xff] %v670
    %688 = vst [vmem:[%s684 + $0x18] sm:$0xff] %v671
    %689 = vst [vmem:[%s684 + $0x20] sm:$0xff] %v672
    %690 = vst [vmem:[%s684 + $0x28] sm:$0xff] %v673
    %691 = vst [vmem:[%s684 + $0x30] sm:$0xff] %v674
    %692 = vst [vmem:[%s684 + $0x38] sm:$0xff] %v675
    %693 = vst [vmem:[%s684 + $0x40] sm:$0xff] %v676
    %694 = vst [vmem:[%s684 + $0x48] sm:$0xff] %v677
    %695 = vst [vmem:[%s684 + $0x50] sm:$0xff] %v678
    %696 = vst [vmem:[%s684 + $0x58] sm:$0xff] %v679
    %697 = vst [vmem:[%s684 + $0x60] sm:$0xff] %v680
    %698 = vst [vmem:[%s684 + $0x68] sm:$0xff] %v681
    %699 = vst [vmem:[%s684 + $0x70] sm:$0xff] %v682
    %700 = vst [vmem:[%s684 + $0x78] sm:$0xff] %v683
    %v701 = vld [vmem:[#allocation7] sm:$0xff]
    %v703 = vsel %vm75, %v701, 0
    %705 = vmatprep.subr.mxu0 0.0
    %706 = vmatpush1.msra.mxu0 %v73
    %707 = vmatprep.subr.mxu0 0.0
    %708 = vmatpush1.msra.mxu0 %v74
    %709 = vmatprep.subr.mxu0 0.0
    %710 = vmatpush1.msra.mxu0 0.0
    %711 = vmatprep.subr.mxu0 0.0
    %712 = vmatpush1.msra.mxu0 0.0
    %713 = vmatprep.subr.mxu0 0.0
    %714 = vmatpush1.msra.mxu0 0.0
    %715 = vmatprep.subr.mxu0 0.0
    %716 = vmatpush1.msra.mxu0 0.0
    %717 = vmatprep.subr.mxu0 0.0
    %718 = vmatpush1.msra.mxu0 0.0
    %719 = vmatprep.subr.mxu0 0.0
    %720 = vmatpush1.msra.mxu0 0.0
    %721 = vmatprep.subr.mxu0 0.0
    %722 = vmatpush1.msra.mxu0 0.0
    %723 = vmatprep.subr.mxu0 0.0
    %724 = vmatpush1.msra.mxu0 0.0
    %725 = vmatprep.subr.mxu0 0.0
    %726 = vmatpush1.msra.mxu0 0.0
    %727 = vmatprep.subr.mxu0 0.0
    %728 = vmatpush1.msra.mxu0 0.0
    %729 = vmatprep.subr.mxu0 0.0
    %730 = vmatpush1.msra.mxu0 0.0
    %731 = vmatprep.subr.mxu0 0.0
    %732 = vmatpush1.msra.mxu0 0.0
    %733 = vmatprep.subr.mxu0 0.0
    %734 = vmatpush1.msra.mxu0 0.0
    %735 = vmatprep.subr.mxu0 0.0
    %736 = vmatpush1.msra.mxu0 0.0
    %737 = vmatprep.subr.mxu0 0.0
    %738 = vmatpush1.msra.mxu0 0.0
    %739 = vmatprep.subr.mxu0 0.0
    %740 = vmatpush1.msra.mxu0 0.0
    %741 = vmatprep.subr.mxu0 0.0
    %742 = vmatpush1.msra.mxu0 0.0
    %743 = vmatprep.subr.mxu0 0.0
    %744 = vmatpush1.msra.mxu0 0.0
    %745 = vmatprep.subr.mxu0 0.0
    %746 = vmatpush1.msra.mxu0 0.0
    %747 = vmatprep.subr.mxu0 0.0
    %748 = vmatpush1.msra.mxu0 0.0
    %749 = vmatprep.subr.mxu0 0.0
    %750 = vmatpush1.msra.mxu0 0.0
    %751 = vmatprep.subr.mxu0 0.0
    %752 = vmatpush1.msra.mxu0 0.0
    %753 = vmatprep.subr.mxu0 0.0
    %754 = vmatpush1.msra.mxu0 0.0
    %755 = vmatprep.subr.mxu0 0.0
    %756 = vmatpush1.msra.mxu0 0.0
    %757 = vmatprep.subr.mxu0 0.0
    %758 = vmatpush1.msra.mxu0 0.0
    %759 = vmatprep.subr.mxu0 0.0
    %760 = vmatpush1.msra.mxu0 0.0
    %761 = vmatprep.subr.mxu0 0.0
    %762 = vmatpush1.msra.mxu0 0.0
    %763 = vmatprep.subr.mxu0 0.0
    %764 = vmatpush1.msra.mxu0 0.0
    %765 = vmatprep.subr.mxu0 0.0
    %766 = vmatpush1.msra.mxu0 0.0
    %767 = vmatprep.subr.mxu0 0.0
    %768 = vmatpush1.msra.mxu0 0.0
    %769 = vmatprep.mubr.f32.mxu0 0.0
    %770 = vmatmul.mubr.f32.gmra.mrb[0].mxu0 %v703
    %v771 = vpop.f32.mrb[0].mxu0
    %v772 = vadd.f32 0.0, %v771
    %v773 = vpop.f32.mrb[0].mxu0
    %774 = vdwg.mxu0
    %775 = vst [vmem:[#allocation9] sm:$0xff] %v772
    // Predicated region
    $region26: #{avwgcn_pallas.2} parent=1 // pred_check
      _
    $region27: #{avwgcn_pallas.2} parent=1 // pred_check_branch
      %777 = sbr.rel (0) target = $region29
    $region28: #{avwgcn_pallas.2} parent=1 // pred_region
      %s779 = ssub.s32 4096, 4096
      %780 = vsyncadd [#allocation4], %s779
      %s781 = sshll.u32 [#allocation8], 4
      %s782 = int_to_ptr.vmem [resolvable:$true] %s781
      %787 = dma.vmem_to_hbm [thread:$0]  %s782, 4096, %s3, [#allocation4], 128, 128, 8
    $region29: #{avwgcn_pallas.2} parent=1 // pred_fallthru
      _
    // Predicated region
    $region30: #{avwgcn_pallas.2} parent=1 // pred_check
      _
    $region31: #{avwgcn_pallas.2} parent=1 // pred_check_branch
      %789 = sbr.rel (0) target = $region33
    $region32: #{avwgcn_pallas.2} parent=1 // pred_region
      %s791 = ssub.s32 128, 128
      %792 = vsyncadd [#allocation10], %s791
      %s794 = sshll.u32 [#allocation9], 4
      %s795 = int_to_ptr.vmem [resolvable:$true] %s794
      %797 = dma.vmem_to_hbm [thread:$0]  %s795, 128, %s4, [#allocation10]
    $region33: #{avwgcn_pallas.2} parent=1 // pred_fallthru
      _
    // Predicated region
    $region34: #{avwgcn_pallas.2} parent=1 // pred_check
      _
    $region35: #{avwgcn_pallas.2} parent=1 // pred_check_branch
      %799 = sbr.rel (0) target = $region37
    $region36: #{avwgcn_pallas.2} parent=1 // pred_region
      %800 = dma.done [#allocation4], 4096
    $region37: #{avwgcn_pallas.2} parent=1 // pred_fallthru
      _
    // Predicated region
    $region38: #{avwgcn_pallas.2} parent=1 // pred_check
      _
    $region39: #{avwgcn_pallas.2} parent=1 // pred_check_branch
      %802 = sbr.rel (0) target = $region41
    $region40: #{avwgcn_pallas.2} parent=1 // pred_region
      %803 = dma.done [#allocation10], 128
    $region41: #{avwgcn_pallas.2} parent=1 // pred_fallthru
      _
    %804 = vsyncpa [#allocation3], 1
    %805 = vsyncpa [#allocation6], 1
    %806 = vsyncpa [#allocation4], 1
    %807 = vsyncpa [#allocation10], 1

// kernel: avwgcn_pallas.3
$region0: #{avwgcn_pallas.3}
  #allocation0 [shape = 'u32[]', space=smem, size = 0x4, offset = 0x4, fixed_abs, tag = 'smem constant byte address 0x4 - core index']
  #allocation1 [shape = 'u32[144,128]{1,0:T(1,128)}', space=vmem, size = 0x12000, scoped, tag = 'internal scratch']
  %s0 = inlined_call_operand.hbm [shape: f32[8,128], index: 0, kind: input, shape index: {}]
  %s1 = inlined_call_operand.hbm [shape: f32[2,128,128], index: 1, kind: input, shape index: {}]
  %s2 = inlined_call_operand.hbm [shape: f32[3,128,4], index: 2, kind: input, shape index: {}]
  %s3 = inlined_call_operand.hbm [shape: f32[16,128], index: 3, kind: input, shape index: {}]
  %s4 = inlined_call_operand.hbm [shape: f32[8,128], index: 4, kind: input, shape index: {}]
  %s5 = inlined_call_operand.hbm [shape: f32[2,8,128], index: 5, kind: output, shape index: {}]
  %s6 = sld [smem:[#allocation0]]
  $region50: #{avwgcn_pallas.3} parent=0
    _
  %s8 = ssub.s32 1, %s6
  %s9 = scalar_select 0, %s8, %s6
  $region1: #{avwgcn_pallas.3} parent=0
    #allocation2 [shape = 'u8[4096]{0}', space=vmem, size = 0x1000, scoped, tag = 'input window, operand 0, single buffered']
    #allocation3 [shape = 's32[1]{0}', space=sflag, size = 0x4, scoped, tag = 'scoped memory for avwgcn_pallas.3']
    #allocation4 [shape = 's32[1]{0}', space=sflag, size = 0x4, scoped, tag = 'scoped memory for avwgcn_pallas.3']
    #allocation5 [shape = 'u8[131072]{0}', space=vmem, size = 0x20000, scoped, tag = 'input window, operand 1, single buffered']
    #allocation6 [shape = 's32[1]{0}', space=sflag, size = 0x4, scoped, tag = 'scoped memory for avwgcn_pallas.3']
    #allocation7 [shape = 'u8[196608]{0}', space=vmem, size = 0x30000, scoped, tag = 'input window, operand 2, single buffered']
    #allocation8 [shape = 'u8[8192]{0}', space=vmem, size = 0x2000, scoped, tag = 'input window, operand 3, single buffered']
    #allocation9 [shape = 's32[1]{0}', space=sflag, size = 0x4, scoped, tag = 'scoped memory for avwgcn_pallas.3']
    #allocation10 [shape = 'u8[4096]{0}', space=vmem, size = 0x1000, scoped, tag = 'input window, operand 4, single buffered']
    #allocation11 [shape = 'u8[8192]{0}', space=vmem, size = 0x2000, scoped, tag = 'output window, operand 0, single buffered']
    %10 = vsyncpa [#allocation3], 0
    %11 = vsyncpa [#allocation6], 0
    %12 = vsyncpa [#allocation9], 0
    %13 = vsyncpa [#allocation4], 0
    // Predicated region
    $region2: #{avwgcn_pallas.3} parent=1 // pred_check
      _
    $region3: #{avwgcn_pallas.3} parent=1 // pred_check_branch
      %15 = sbr.rel (0) target = $region5
    $region4: #{avwgcn_pallas.3} parent=1 // pred_region
      %s17 = ssub.s32 128, 128
      %18 = vsyncadd [#allocation3], %s17
      %s20 = sshll.u32 [#allocation2], 4
      %s21 = int_to_ptr.vmem [resolvable:$true] %s20
      %23 = dma.hbm_to_vmem [thread:$0]  %s0, 128, %s21, [#allocation3]
    $region5: #{avwgcn_pallas.3} parent=1 // pred_fallthru
      _
    // Predicated region
    $region6: #{avwgcn_pallas.3} parent=1 // pred_check
      _
    $region7: #{avwgcn_pallas.3} parent=1 // pred_check_branch
      %25 = sbr.rel (0) target = $region9
    $region8: #{avwgcn_pallas.3} parent=1 // pred_region
      %s27 = ssub.s32 4096, 4096
      %28 = vsyncadd [#allocation6], %s27
      %s29 = sshll.u32 [#allocation5], 4
      %s30 = int_to_ptr.vmem [resolvable:$true] %s29
      %35 = dma.hbm_to_vmem [thread:$0]  %s1, 4096, %s30, [#allocation6], 128, 128, 8
    $region9: #{avwgcn_pallas.3} parent=1 // pred_fallthru
      _
    // Predicated region
    $region10: #{avwgcn_pallas.3} parent=1 // pred_check
      _
    $region11: #{avwgcn_pallas.3} parent=1 // pred_check_branch
      %37 = sbr.rel (0) target = $region13
    $region12: #{avwgcn_pallas.3} parent=1 // pred_region
      %s39 = ssub.s32 6144, 6144
      %40 = vsyncadd [#allocation6], %s39
      %s41 = sshll.u32 [#allocation7], 4
      %s42 = int_to_ptr.vmem [resolvable:$true] %s41
      %47 = dma.hbm_to_vmem [thread:$0]  %s2, 6144, %s42, [#allocation6], 128, 128, 8
    $region13: #{avwgcn_pallas.3} parent=1 // pred_fallthru
      _
    // Predicated region
    $region14: #{avwgcn_pallas.3} parent=1 // pred_check
      _
    $region15: #{avwgcn_pallas.3} parent=1 // pred_check_branch
      %49 = sbr.rel (0) target = $region17
    $region16: #{avwgcn_pallas.3} parent=1 // pred_region
      %s51 = ssub.s32 256, 256
      %52 = vsyncadd [#allocation9], %s51
      %s53 = sshll.u32 [#allocation8], 4
      %s54 = int_to_ptr.vmem [resolvable:$true] %s53
      %59 = dma.hbm_to_vmem [thread:$0]  %s3, 256, %s54, [#allocation9], 128, 128, 8
    $region17: #{avwgcn_pallas.3} parent=1 // pred_fallthru
      _
    // Predicated region
    $region18: #{avwgcn_pallas.3} parent=1 // pred_check
      _
    $region19: #{avwgcn_pallas.3} parent=1 // pred_check_branch
      %61 = sbr.rel (0) target = $region21
    $region20: #{avwgcn_pallas.3} parent=1 // pred_region
      %s63 = ssub.s32 128, 128
      %64 = vsyncadd [#allocation9], %s63
      %s66 = sshll.u32 [#allocation10], 4
      %s67 = int_to_ptr.vmem [resolvable:$true] %s66
      %69 = dma.hbm_to_vmem [thread:$0]  %s4, 128, %s67, [#allocation9]
    $region21: #{avwgcn_pallas.3} parent=1 // pred_fallthru
      _
    // Predicated region
    $region22: #{avwgcn_pallas.3} parent=1 // pred_check
      _
    $region23: #{avwgcn_pallas.3} parent=1 // pred_check_branch
      %71 = sbr.rel (0) target = $region25
    $region24: #{avwgcn_pallas.3} parent=1 // pred_region
      %72 = dma.done [#allocation3], 128
    $region25: #{avwgcn_pallas.3} parent=1 // pred_fallthru
      _
    // Predicated region
    $region26: #{avwgcn_pallas.3} parent=1 // pred_check
      _
    $region27: #{avwgcn_pallas.3} parent=1 // pred_check_branch
      %74 = sbr.rel (0) target = $region29
    $region28: #{avwgcn_pallas.3} parent=1 // pred_region
      %75 = dma.done [#allocation6], 4096
    $region29: #{avwgcn_pallas.3} parent=1 // pred_fallthru
      _
    // Predicated region
    $region30: #{avwgcn_pallas.3} parent=1 // pred_check
      _
    $region31: #{avwgcn_pallas.3} parent=1 // pred_check_branch
      %77 = sbr.rel (0) target = $region33
    $region32: #{avwgcn_pallas.3} parent=1 // pred_region
      %78 = dma.done [#allocation6], 6144
    $region33: #{avwgcn_pallas.3} parent=1 // pred_fallthru
      _
    // Predicated region
    $region34: #{avwgcn_pallas.3} parent=1 // pred_check
      _
    $region35: #{avwgcn_pallas.3} parent=1 // pred_check_branch
      %80 = sbr.rel (0) target = $region37
    $region36: #{avwgcn_pallas.3} parent=1 // pred_region
      %81 = dma.done [#allocation9], 256
    $region37: #{avwgcn_pallas.3} parent=1 // pred_fallthru
      _
    // Predicated region
    $region38: #{avwgcn_pallas.3} parent=1 // pred_check
      _
    $region39: #{avwgcn_pallas.3} parent=1 // pred_check_branch
      %83 = sbr.rel (0) target = $region41
    $region40: #{avwgcn_pallas.3} parent=1 // pred_region
      %84 = dma.done [#allocation9], 128
    $region41: #{avwgcn_pallas.3} parent=1 // pred_fallthru
      _
    %v85 = vld [vmem:[#allocation2] sm:$0xff]
    %v86 = vld [vmem:[#allocation5] sm:$0xff]
    %v87 = vld [vmem:[#allocation5 + $0x8] sm:$0xff]
    %v88 = vld [vmem:[#allocation5 + $0x10] sm:$0xff]
    %v89 = vld [vmem:[#allocation5 + $0x18] sm:$0xff]
    %v90 = vld [vmem:[#allocation5 + $0x20] sm:$0xff]
    %v91 = vld [vmem:[#allocation5 + $0x28] sm:$0xff]
    %v92 = vld [vmem:[#allocation5 + $0x30] sm:$0xff]
    %v93 = vld [vmem:[#allocation5 + $0x38] sm:$0xff]
    %v94 = vld [vmem:[#allocation5 + $0x40] sm:$0xff]
    %v95 = vld [vmem:[#allocation5 + $0x48] sm:$0xff]
    %v96 = vld [vmem:[#allocation5 + $0x50] sm:$0xff]
    %v97 = vld [vmem:[#allocation5 + $0x58] sm:$0xff]
    %v98 = vld [vmem:[#allocation5 + $0x60] sm:$0xff]
    %v99 = vld [vmem:[#allocation5 + $0x68] sm:$0xff]
    %v100 = vld [vmem:[#allocation5 + $0x70] sm:$0xff]
    %v101 = vld [vmem:[#allocation5 + $0x78] sm:$0xff]
    %102 = vmatprep.subr.mxu0 0.0
    %103 = vmatpush1.msra.mxu0 %v86
    %104 = vmatprep.subr.mxu0 0.0
    %105 = vmatpush1.msra.mxu0 %v87
    %106 = vmatprep.subr.mxu0 0.0
    %107 = vmatpush1.msra.mxu0 %v88
    %108 = vmatprep.subr.mxu0 0.0
    %109 = vmatpush1.msra.mxu0 %v89
    %110 = vmatprep.subr.mxu0 0.0
    %111 = vmatpush1.msra.mxu0 %v90
    %112 = vmatprep.subr.mxu0 0.0
    %113 = vmatpush1.msra.mxu0 %v91
    %114 = vmatprep.subr.mxu0 0.0
    %115 = vmatpush1.msra.mxu0 %v92
    %116 = vmatprep.subr.mxu0 0.0
    %117 = vmatpush1.msra.mxu0 %v93
    %118 = vmatprep.subr.mxu0 0.0
    %119 = vmatpush1.msra.mxu0 %v94
    %120 = vmatprep.subr.mxu0 0.0
    %121 = vmatpush1.msra.mxu0 %v95
    %122 = vmatprep.subr.mxu0 0.0
    %123 = vmatpush1.msra.mxu0 %v96
    %124 = vmatprep.subr.mxu0 0.0
    %125 = vmatpush1.msra.mxu0 %v97
    %126 = vmatprep.subr.mxu0 0.0
    %127 = vmatpush1.msra.mxu0 %v98
    %128 = vmatprep.subr.mxu0 0.0
    %129 = vmatpush1.msra.mxu0 %v99
    %130 = vmatprep.subr.mxu0 0.0
    %131 = vmatpush1.msra.mxu0 %v100
    %132 = vmatprep.subr.mxu0 0.0
    %133 = vmatpush1.msra.mxu0 %v101
    %134 = vmatprep.subr.mxu0 0.0
    %135 = vmatpush1.msra.mxu0 0.0
    %136 = vmatprep.subr.mxu0 0.0
    %137 = vmatpush1.msra.mxu0 0.0
    %138 = vmatprep.subr.mxu0 0.0
    %139 = vmatpush1.msra.mxu0 0.0
    %140 = vmatprep.subr.mxu0 0.0
    %141 = vmatpush1.msra.mxu0 0.0
    %142 = vmatprep.subr.mxu0 0.0
    %143 = vmatpush1.msra.mxu0 0.0
    %144 = vmatprep.subr.mxu0 0.0
    %145 = vmatpush1.msra.mxu0 0.0
    %146 = vmatprep.subr.mxu0 0.0
    %147 = vmatpush1.msra.mxu0 0.0
    %148 = vmatprep.subr.mxu0 0.0
    %149 = vmatpush1.msra.mxu0 0.0
    %150 = vmatprep.subr.mxu0 0.0
    %151 = vmatpush1.msra.mxu0 0.0
    %152 = vmatprep.subr.mxu0 0.0
    %153 = vmatpush1.msra.mxu0 0.0
    %154 = vmatprep.subr.mxu0 0.0
    %155 = vmatpush1.msra.mxu0 0.0
    %156 = vmatprep.subr.mxu0 0.0
    %157 = vmatpush1.msra.mxu0 0.0
    %158 = vmatprep.subr.mxu0 0.0
    %159 = vmatpush1.msra.mxu0 0.0
    %160 = vmatprep.subr.mxu0 0.0
    %161 = vmatpush1.msra.mxu0 0.0
    %162 = vmatprep.subr.mxu0 0.0
    %163 = vmatpush1.msra.mxu0 0.0
    %164 = vmatprep.subr.mxu0 0.0
    %165 = vmatpush1.msra.mxu0 0.0
    %166 = vmatprep.mubr.f32.mxu0 0.0
    %167 = vmatmul.mubr.f32.gmra.mrb[0].mxu0 %v85
    %v168 = vpop.f32.mrb[0].mxu0
    %v169 = vadd.f32 0.0, %v168
    %v170 = vpop.f32.mrb[0].mxu0
    %171 = vdwg.mxu0
    %s172 = scalar_lea.vmem [#allocation5], 128
    %v173 = vld [vmem:[%s172] sm:$0xff]
    %v174 = vld [vmem:[%s172 + $0x8] sm:$0xff]
    %v175 = vld [vmem:[%s172 + $0x10] sm:$0xff]
    %v176 = vld [vmem:[%s172 + $0x18] sm:$0xff]
    %v177 = vld [vmem:[%s172 + $0x20] sm:$0xff]
    %v178 = vld [vmem:[%s172 + $0x28] sm:$0xff]
    %v179 = vld [vmem:[%s172 + $0x30] sm:$0xff]
    %v180 = vld [vmem:[%s172 + $0x38] sm:$0xff]
    %v181 = vld [vmem:[%s172 + $0x40] sm:$0xff]
    %v182 = vld [vmem:[%s172 + $0x48] sm:$0xff]
    %v183 = vld [vmem:[%s172 + $0x50] sm:$0xff]
    %v184 = vld [vmem:[%s172 + $0x58] sm:$0xff]
    %v185 = vld [vmem:[%s172 + $0x60] sm:$0xff]
    %v186 = vld [vmem:[%s172 + $0x68] sm:$0xff]
    %v187 = vld [vmem:[%s172 + $0x70] sm:$0xff]
    %v188 = vld [vmem:[%s172 + $0x78] sm:$0xff]
    %189 = vmatprep.subr.mxu0 0.0
    %190 = vmatpush1.msra.mxu0 %v173
    %191 = vmatprep.subr.mxu0 0.0
    %192 = vmatpush1.msra.mxu0 %v174
    %193 = vmatprep.subr.mxu0 0.0
    %194 = vmatpush1.msra.mxu0 %v175
    %195 = vmatprep.subr.mxu0 0.0
    %196 = vmatpush1.msra.mxu0 %v176
    %197 = vmatprep.subr.mxu0 0.0
    %198 = vmatpush1.msra.mxu0 %v177
    %199 = vmatprep.subr.mxu0 0.0
    %200 = vmatpush1.msra.mxu0 %v178
    %201 = vmatprep.subr.mxu0 0.0
    %202 = vmatpush1.msra.mxu0 %v179
    %203 = vmatprep.subr.mxu0 0.0
    %204 = vmatpush1.msra.mxu0 %v180
    %205 = vmatprep.subr.mxu0 0.0
    %206 = vmatpush1.msra.mxu0 %v181
    %207 = vmatprep.subr.mxu0 0.0
    %208 = vmatpush1.msra.mxu0 %v182
    %209 = vmatprep.subr.mxu0 0.0
    %210 = vmatpush1.msra.mxu0 %v183
    %211 = vmatprep.subr.mxu0 0.0
    %212 = vmatpush1.msra.mxu0 %v184
    %213 = vmatprep.subr.mxu0 0.0
    %214 = vmatpush1.msra.mxu0 %v185
    %215 = vmatprep.subr.mxu0 0.0
    %216 = vmatpush1.msra.mxu0 %v186
    %217 = vmatprep.subr.mxu0 0.0
    %218 = vmatpush1.msra.mxu0 %v187
    %219 = vmatprep.subr.mxu0 0.0
    %220 = vmatpush1.msra.mxu0 %v188
    %221 = vmatprep.subr.mxu0 0.0
    %222 = vmatpush1.msra.mxu0 0.0
    %223 = vmatprep.subr.mxu0 0.0
    %224 = vmatpush1.msra.mxu0 0.0
    %225 = vmatprep.subr.mxu0 0.0
    %226 = vmatpush1.msra.mxu0 0.0
    %227 = vmatprep.subr.mxu0 0.0
    %228 = vmatpush1.msra.mxu0 0.0
    %229 = vmatprep.subr.mxu0 0.0
    %230 = vmatpush1.msra.mxu0 0.0
    %231 = vmatprep.subr.mxu0 0.0
    %232 = vmatpush1.msra.mxu0 0.0
    %233 = vmatprep.subr.mxu0 0.0
    %234 = vmatpush1.msra.mxu0 0.0
    %235 = vmatprep.subr.mxu0 0.0
    %236 = vmatpush1.msra.mxu0 0.0
    %237 = vmatprep.subr.mxu0 0.0
    %238 = vmatpush1.msra.mxu0 0.0
    %239 = vmatprep.subr.mxu0 0.0
    %240 = vmatpush1.msra.mxu0 0.0
    %241 = vmatprep.subr.mxu0 0.0
    %242 = vmatpush1.msra.mxu0 0.0
    %243 = vmatprep.subr.mxu0 0.0
    %244 = vmatpush1.msra.mxu0 0.0
    %245 = vmatprep.subr.mxu0 0.0
    %246 = vmatpush1.msra.mxu0 0.0
    %247 = vmatprep.subr.mxu0 0.0
    %248 = vmatpush1.msra.mxu0 0.0
    %249 = vmatprep.subr.mxu0 0.0
    %250 = vmatpush1.msra.mxu0 0.0
    %251 = vmatprep.subr.mxu0 0.0
    %252 = vmatpush1.msra.mxu0 0.0
    %253 = vmatprep.mubr.f32.mxu0 0.0
    %254 = vmatmul.mubr.f32.gmra.mrb[0].mxu0 %v85
    %v255 = vpop.f32.mrb[0].mxu0
    %v256 = vadd.f32 0.0, %v255
    %v257 = vpop.f32.mrb[0].mxu0
    %258 = vdwg.mxu0
    %v259 = vld [vmem:[#allocation8] sm:$0xff]
    %v260 = vld [vmem:[#allocation8 + $0x8] sm:$0xff]
    %v261 = vld [vmem:[#allocation10] sm:$0xff]
    %v262 = vld [vmem:[#allocation7] sm:$0xff]
    %v263 = vld [vmem:[#allocation7 + $0x8] sm:$0xff]
    %v264 = vld [vmem:[#allocation7 + $0x10] sm:$0xff]
    %v265 = vld [vmem:[#allocation7 + $0x18] sm:$0xff]
    %v266 = vld [vmem:[#allocation7 + $0x20] sm:$0xff]
    %v267 = vld [vmem:[#allocation7 + $0x28] sm:$0xff]
    %v268 = vld [vmem:[#allocation7 + $0x30] sm:$0xff]
    %v269 = vld [vmem:[#allocation7 + $0x38] sm:$0xff]
    %v270 = vld [vmem:[#allocation7 + $0x40] sm:$0xff]
    %v271 = vld [vmem:[#allocation7 + $0x48] sm:$0xff]
    %v272 = vld [vmem:[#allocation7 + $0x50] sm:$0xff]
    %v273 = vld [vmem:[#allocation7 + $0x58] sm:$0xff]
    %v274 = vld [vmem:[#allocation7 + $0x60] sm:$0xff]
    %v275 = vld [vmem:[#allocation7 + $0x68] sm:$0xff]
    %v276 = vld [vmem:[#allocation7 + $0x70] sm:$0xff]
    %v277 = vld [vmem:[#allocation7 + $0x78] sm:$0xff]
    %s278 = scalar_lea.vmem [#allocation7], 128
    %v279 = vld [vmem:[%s278] sm:$0xff]
    %v280 = vld [vmem:[%s278 + $0x8] sm:$0xff]
    %v281 = vld [vmem:[%s278 + $0x10] sm:$0xff]
    %v282 = vld [vmem:[%s278 + $0x18] sm:$0xff]
    %v283 = vld [vmem:[%s278 + $0x20] sm:$0xff]
    %v284 = vld [vmem:[%s278 + $0x28] sm:$0xff]
    %v285 = vld [vmem:[%s278 + $0x30] sm:$0xff]
    %v286 = vld [vmem:[%s278 + $0x38] sm:$0xff]
    %v287 = vld [vmem:[%s278 + $0x40] sm:$0xff]
    %v288 = vld [vmem:[%s278 + $0x48] sm:$0xff]
    %v289 = vld [vmem:[%s278 + $0x50] sm:$0xff]
    %v290 = vld [vmem:[%s278 + $0x58] sm:$0xff]
    %v291 = vld [vmem:[%s278 + $0x60] sm:$0xff]
    %v292 = vld [vmem:[%s278 + $0x68] sm:$0xff]
    %v293 = vld [vmem:[%s278 + $0x70] sm:$0xff]
    %v294 = vld [vmem:[%s278 + $0x78] sm:$0xff]
    %vm295 = vcmask 31744
    %v297 = vsel %vm295, %v279, 0
    %v300 = vsel %vm295, %v280, 0
    %v303 = vsel %vm295, %v281, 0
    %v306 = vsel %vm295, %v282, 0
    %v309 = vsel %vm295, %v283, 0
    %v312 = vsel %vm295, %v284, 0
    %v315 = vsel %vm295, %v285, 0
    %v318 = vsel %vm295, %v286, 0
    %v321 = vsel %vm295, %v287, 0
    %v324 = vsel %vm295, %v288, 0
    %v327 = vsel %vm295, %v289, 0
    %v330 = vsel %vm295, %v290, 0
    %v333 = vsel %vm295, %v291, 0
    %v336 = vsel %vm295, %v292, 0
    %v339 = vsel %vm295, %v293, 0
    %v342 = vsel %vm295, %v294, 0
    %vm344 = vcmask 1043456
    %v346 = vsel %vm344, %v169, 0
    %348 = vmatprep.subr.mxu0 0.0
    %349 = vmatpush1.msra.mxu0 %v346
    %350 = vmatprep.subr.mxu0 0.0
    %351 = vmatpush1.msra.mxu0 0.0
    %352 = vmatprep.subr.mxu0 0.0
    %353 = vmatpush1.msra.mxu0 0.0
    %354 = vmatprep.subr.mxu0 0.0
    %355 = vmatpush1.msra.mxu0 0.0
    %356 = vmatprep.subr.mxu0 0.0
    %357 = vmatpush1.msra.mxu0 0.0
    %358 = vmatprep.subr.mxu0 0.0
    %359 = vmatpush1.msra.mxu0 0.0
    %360 = vmatprep.subr.mxu0 0.0
    %361 = vmatpush1.msra.mxu0 0.0
    %362 = vmatprep.subr.mxu0 0.0
    %363 = vmatpush1.msra.mxu0 0.0
    %364 = vmatprep.subr.mxu0 0.0
    %365 = vmatpush1.msra.mxu0 0.0
    %366 = vmatprep.subr.mxu0 0.0
    %367 = vmatpush1.msra.mxu0 0.0
    %368 = vmatprep.subr.mxu0 0.0
    %369 = vmatpush1.msra.mxu0 0.0
    %370 = vmatprep.subr.mxu0 0.0
    %371 = vmatpush1.msra.mxu0 0.0
    %372 = vmatprep.subr.mxu0 0.0
    %373 = vmatpush1.msra.mxu0 0.0
    %374 = vmatprep.subr.mxu0 0.0
    %375 = vmatpush1.msra.mxu0 0.0
    %376 = vmatprep.subr.mxu0 0.0
    %377 = vmatpush1.msra.mxu0 0.0
    %378 = vmatprep.subr.mxu0 0.0
    %379 = vmatpush1.msra.mxu0 0.0
    %380 = vmatprep.subr.mxu0 0.0
    %381 = vmatpush1.msra.mxu0 0.0
    %382 = vmatprep.subr.mxu0 0.0
    %383 = vmatpush1.msra.mxu0 0.0
    %384 = vmatprep.subr.mxu0 0.0
    %385 = vmatpush1.msra.mxu0 0.0
    %386 = vmatprep.subr.mxu0 0.0
    %387 = vmatpush1.msra.mxu0 0.0
    %388 = vmatprep.subr.mxu0 0.0
    %389 = vmatpush1.msra.mxu0 0.0
    %390 = vmatprep.subr.mxu0 0.0
    %391 = vmatpush1.msra.mxu0 0.0
    %392 = vmatprep.subr.mxu0 0.0
    %393 = vmatpush1.msra.mxu0 0.0
    %394 = vmatprep.subr.mxu0 0.0
    %395 = vmatpush1.msra.mxu0 0.0
    %396 = vmatprep.subr.mxu0 0.0
    %397 = vmatpush1.msra.mxu0 0.0
    %398 = vmatprep.subr.mxu0 0.0
    %399 = vmatpush1.msra.mxu0 0.0
    %400 = vmatprep.subr.mxu0 0.0
    %401 = vmatpush1.msra.mxu0 0.0
    %402 = vmatprep.subr.mxu0 0.0
    %403 = vmatpush1.msra.mxu0 0.0
    %404 = vmatprep.subr.mxu0 0.0
    %405 = vmatpush1.msra.mxu0 0.0
    %406 = vmatprep.subr.mxu0 0.0
    %407 = vmatpush1.msra.mxu0 0.0
    %408 = vmatprep.subr.mxu0 0.0
    %409 = vmatpush1.msra.mxu0 0.0
    %410 = vmatprep.subr.mxu0 0.0
    %411 = vmatpush1.msra.mxu0 0.0
    %412 = vmatprep.mubr.f32.mxu0 0.0
    %413 = vmatmul.mubr.f32.gmra.mrb[0].mxu0 %v297
    %v414 = vpop.f32.mrb[0].mxu0
    %v415 = vadd.f32 0.0, %v414
    %v416 = vpop.f32.mrb[0].mxu0
    %417 = vmatprep.mubr.f32.mxu0 0.0
    %418 = vmatmul.mubr.f32.gmra.mrb[0].mxu0 %v300
    %v419 = vpop.f32.mrb[0].mxu0
    %v420 = vadd.f32 0.0, %v419
    %v421 = vpop.f32.mrb[0].mxu0
    %422 = vmatprep.mubr.f32.mxu0 0.0
    %423 = vmatmul.mubr.f32.gmra.mrb[0].mxu0 %v303
    %v424 = vpop.f32.mrb[0].mxu0
    %v425 = vadd.f32 0.0, %v424
    %v426 = vpop.f32.mrb[0].mxu0
    %427 = vmatprep.mubr.f32.mxu0 0.0
    %428 = vmatmul.mubr.f32.gmra.mrb[0].mxu0 %v306
    %v429 = vpop.f32.mrb[0].mxu0
    %v430 = vadd.f32 0.0, %v429
    %v431 = vpop.f32.mrb[0].mxu0
    %432 = vmatprep.mubr.f32.mxu0 0.0
    %433 = vmatmul.mubr.f32.gmra.mrb[0].mxu0 %v309
    %v434 = vpop.f32.mrb[0].mxu0
    %v435 = vadd.f32 0.0, %v434
    %v436 = vpop.f32.mrb[0].mxu0
    %437 = vmatprep.mubr.f32.mxu0 0.0
    %438 = vmatmul.mubr.f32.gmra.mrb[0].mxu0 %v312
    %v439 = vpop.f32.mrb[0].mxu0
    %v440 = vadd.f32 0.0, %v439
    %v441 = vpop.f32.mrb[0].mxu0
    %442 = vmatprep.mubr.f32.mxu0 0.0
    %443 = vmatmul.mubr.f32.gmra.mrb[0].mxu0 %v315
    %v444 = vpop.f32.mrb[0].mxu0
    %v445 = vadd.f32 0.0, %v444
    %v446 = vpop.f32.mrb[0].mxu0
    %447 = vmatprep.mubr.f32.mxu0 0.0
    %448 = vmatmul.mubr.f32.gmra.mrb[0].mxu0 %v318
    %v449 = vpop.f32.mrb[0].mxu0
    %v450 = vadd.f32 0.0, %v449
    %v451 = vpop.f32.mrb[0].mxu0
    %452 = vmatprep.mubr.f32.mxu0 0.0
    %453 = vmatmul.mubr.f32.gmra.mrb[0].mxu0 %v321
    %v454 = vpop.f32.mrb[0].mxu0
    %v455 = vadd.f32 0.0, %v454
    %v456 = vpop.f32.mrb[0].mxu0
    %457 = vmatprep.mubr.f32.mxu0 0.0
    %458 = vmatmul.mubr.f32.gmra.mrb[0].mxu0 %v324
    %v459 = vpop.f32.mrb[0].mxu0
    %v460 = vadd.f32 0.0, %v459
    %v461 = vpop.f32.mrb[0].mxu0
    %462 = vmatprep.mubr.f32.mxu0 0.0
    %463 = vmatmul.mubr.f32.gmra.mrb[0].mxu0 %v327
    %v464 = vpop.f32.mrb[0].mxu0
    %v465 = vadd.f32 0.0, %v464
    %v466 = vpop.f32.mrb[0].mxu0
    %467 = vmatprep.mubr.f32.mxu0 0.0
    %468 = vmatmul.mubr.f32.gmra.mrb[0].mxu0 %v330
    %v469 = vpop.f32.mrb[0].mxu0
    %v470 = vadd.f32 0.0, %v469
    %v471 = vpop.f32.mrb[0].mxu0
    %472 = vmatprep.mubr.f32.mxu0 0.0
    %473 = vmatmul.mubr.f32.gmra.mrb[0].mxu0 %v333
    %v474 = vpop.f32.mrb[0].mxu0
    %v475 = vadd.f32 0.0, %v474
    %v476 = vpop.f32.mrb[0].mxu0
    %477 = vmatprep.mubr.f32.mxu0 0.0
    %478 = vmatmul.mubr.f32.gmra.mrb[0].mxu0 %v336
    %v479 = vpop.f32.mrb[0].mxu0
    %v480 = vadd.f32 0.0, %v479
    %v481 = vpop.f32.mrb[0].mxu0
    %482 = vmatprep.mubr.f32.mxu0 0.0
    %483 = vmatmul.mubr.f32.gmra.mrb[0].mxu0 %v339
    %v484 = vpop.f32.mrb[0].mxu0
    %v485 = vadd.f32 0.0, %v484
    %v486 = vpop.f32.mrb[0].mxu0
    %487 = vmatprep.mubr.f32.mxu0 0.0
    %488 = vmatmul.mubr.f32.gmra.mrb[0].mxu0 %v342
    %v489 = vpop.f32.mrb[0].mxu0
    %v490 = vadd.f32 0.0, %v489
    %v491 = vpop.f32.mrb[0].mxu0
    %492 = vdwg.mxu0
    %v494 = vsel %vm295, %v262, 0
    %v497 = vsel %vm295, %v263, 0
    %v500 = vsel %vm295, %v264, 0
    %v503 = vsel %vm295, %v265, 0
    %v506 = vsel %vm295, %v266, 0
    %v509 = vsel %vm295, %v267, 0
    %v512 = vsel %vm295, %v268, 0
    %v515 = vsel %vm295, %v269, 0
    %v518 = vsel %vm295, %v270, 0
    %v521 = vsel %vm295, %v271, 0
    %v524 = vsel %vm295, %v272, 0
    %v527 = vsel %vm295, %v273, 0
    %v530 = vsel %vm295, %v274, 0
    %v533 = vsel %vm295, %v275, 0
    %v536 = vsel %vm295, %v276, 0
    %v539 = vsel %vm295, %v277, 0
    %v542 = vsel %vm344, %v85, 0
    %544 = vmatprep.subr.mxu0 0.0
    %545 = vmatpush1.msra.mxu0 %v542
    %546 = vmatprep.subr.mxu0 0.0
    %547 = vmatpush1.msra.mxu0 0.0
    %548 = vmatprep.subr.mxu0 0.0
    %549 = vmatpush1.msra.mxu0 0.0
    %550 = vmatprep.subr.mxu0 0.0
    %551 = vmatpush1.msra.mxu0 0.0
    %552 = vmatprep.subr.mxu0 0.0
    %553 = vmatpush1.msra.mxu0 0.0
    %554 = vmatprep.subr.mxu0 0.0
    %555 = vmatpush1.msra.mxu0 0.0
    %556 = vmatprep.subr.mxu0 0.0
    %557 = vmatpush1.msra.mxu0 0.0
    %558 = vmatprep.subr.mxu0 0.0
    %559 = vmatpush1.msra.mxu0 0.0
    %560 = vmatprep.subr.mxu0 0.0
    %561 = vmatpush1.msra.mxu0 0.0
    %562 = vmatprep.subr.mxu0 0.0
    %563 = vmatpush1.msra.mxu0 0.0
    %564 = vmatprep.subr.mxu0 0.0
    %565 = vmatpush1.msra.mxu0 0.0
    %566 = vmatprep.subr.mxu0 0.0
    %567 = vmatpush1.msra.mxu0 0.0
    %568 = vmatprep.subr.mxu0 0.0
    %569 = vmatpush1.msra.mxu0 0.0
    %570 = vmatprep.subr.mxu0 0.0
    %571 = vmatpush1.msra.mxu0 0.0
    %572 = vmatprep.subr.mxu0 0.0
    %573 = vmatpush1.msra.mxu0 0.0
    %574 = vmatprep.subr.mxu0 0.0
    %575 = vmatpush1.msra.mxu0 0.0
    %576 = vmatprep.subr.mxu0 0.0
    %577 = vmatpush1.msra.mxu0 0.0
    %578 = vmatprep.subr.mxu0 0.0
    %579 = vmatpush1.msra.mxu0 0.0
    %580 = vmatprep.subr.mxu0 0.0
    %581 = vmatpush1.msra.mxu0 0.0
    %582 = vmatprep.subr.mxu0 0.0
    %583 = vmatpush1.msra.mxu0 0.0
    %584 = vmatprep.subr.mxu0 0.0
    %585 = vmatpush1.msra.mxu0 0.0
    %586 = vmatprep.subr.mxu0 0.0
    %587 = vmatpush1.msra.mxu0 0.0
    %588 = vmatprep.subr.mxu0 0.0
    %589 = vmatpush1.msra.mxu0 0.0
    %590 = vmatprep.subr.mxu0 0.0
    %591 = vmatpush1.msra.mxu0 0.0
    %592 = vmatprep.subr.mxu0 0.0
    %593 = vmatpush1.msra.mxu0 0.0
    %594 = vmatprep.subr.mxu0 0.0
    %595 = vmatpush1.msra.mxu0 0.0
    %596 = vmatprep.subr.mxu0 0.0
    %597 = vmatpush1.msra.mxu0 0.0
    %598 = vmatprep.subr.mxu0 0.0
    %599 = vmatpush1.msra.mxu0 0.0
    %600 = vmatprep.subr.mxu0 0.0
    %601 = vmatpush1.msra.mxu0 0.0
    %602 = vmatprep.subr.mxu0 0.0
    %603 = vmatpush1.msra.mxu0 0.0
    %604 = vmatprep.subr.mxu0 0.0
    %605 = vmatpush1.msra.mxu0 0.0
    %606 = vmatprep.subr.mxu0 0.0
    %607 = vmatpush1.msra.mxu0 0.0
    %608 = vmatprep.mubr.f32.mxu0 0.0
    %609 = vmatmul.mubr.f32.gmra.mrb[0].mxu0 %v494
    %v610 = vpop.f32.mrb[0].mxu0
    %v611 = vadd.f32 %v415, %v610
    %v612 = vpop.f32.mrb[0].mxu0
    %613 = vmatprep.mubr.f32.mxu0 0.0
    %614 = vmatmul.mubr.f32.gmra.mrb[0].mxu0 %v497
    %v615 = vpop.f32.mrb[0].mxu0
    %v616 = vadd.f32 %v420, %v615
    %v617 = vpop.f32.mrb[0].mxu0
    %618 = vmatprep.mubr.f32.mxu0 0.0
    %619 = vmatmul.mubr.f32.gmra.mrb[0].mxu0 %v500
    %v620 = vpop.f32.mrb[0].mxu0
    %v621 = vadd.f32 %v425, %v620
    %v622 = vpop.f32.mrb[0].mxu0
    %623 = vmatprep.mubr.f32.mxu0 0.0
    %624 = vmatmul.mubr.f32.gmra.mrb[0].mxu0 %v503
    %v625 = vpop.f32.mrb[0].mxu0
    %v626 = vadd.f32 %v430, %v625
    %v627 = vpop.f32.mrb[0].mxu0
    %628 = vmatprep.mubr.f32.mxu0 0.0
    %629 = vmatmul.mubr.f32.gmra.mrb[0].mxu0 %v506
    %v630 = vpop.f32.mrb[0].mxu0
    %v631 = vadd.f32 %v435, %v630
    %v632 = vpop.f32.mrb[0].mxu0
    %633 = vmatprep.mubr.f32.mxu0 0.0
    %634 = vmatmul.mubr.f32.gmra.mrb[0].mxu0 %v509
    %v635 = vpop.f32.mrb[0].mxu0
    %v636 = vadd.f32 %v440, %v635
    %v637 = vpop.f32.mrb[0].mxu0
    %638 = vmatprep.mubr.f32.mxu0 0.0
    %639 = vmatmul.mubr.f32.gmra.mrb[0].mxu0 %v512
    %v640 = vpop.f32.mrb[0].mxu0
    %v641 = vadd.f32 %v445, %v640
    %v642 = vpop.f32.mrb[0].mxu0
    %643 = vmatprep.mubr.f32.mxu0 0.0
    %644 = vmatmul.mubr.f32.gmra.mrb[0].mxu0 %v515
    %v645 = vpop.f32.mrb[0].mxu0
    %v646 = vadd.f32 %v450, %v645
    %v647 = vpop.f32.mrb[0].mxu0
    %648 = vmatprep.mubr.f32.mxu0 0.0
    %649 = vmatmul.mubr.f32.gmra.mrb[0].mxu0 %v518
    %v650 = vpop.f32.mrb[0].mxu0
    %v651 = vadd.f32 %v455, %v650
    %v652 = vpop.f32.mrb[0].mxu0
    %653 = vmatprep.mubr.f32.mxu0 0.0
    %654 = vmatmul.mubr.f32.gmra.mrb[0].mxu0 %v521
    %v655 = vpop.f32.mrb[0].mxu0
    %v656 = vadd.f32 %v460, %v655
    %v657 = vpop.f32.mrb[0].mxu0
    %658 = vmatprep.mubr.f32.mxu0 0.0
    %659 = vmatmul.mubr.f32.gmra.mrb[0].mxu0 %v524
    %v660 = vpop.f32.mrb[0].mxu0
    %v661 = vadd.f32 %v465, %v660
    %v662 = vpop.f32.mrb[0].mxu0
    %663 = vmatprep.mubr.f32.mxu0 0.0
    %664 = vmatmul.mubr.f32.gmra.mrb[0].mxu0 %v527
    %v665 = vpop.f32.mrb[0].mxu0
    %v666 = vadd.f32 %v470, %v665
    %v667 = vpop.f32.mrb[0].mxu0
    %668 = vmatprep.mubr.f32.mxu0 0.0
    %669 = vmatmul.mubr.f32.gmra.mrb[0].mxu0 %v530
    %v670 = vpop.f32.mrb[0].mxu0
    %v671 = vadd.f32 %v475, %v670
    %v672 = vpop.f32.mrb[0].mxu0
    %673 = vmatprep.mubr.f32.mxu0 0.0
    %674 = vmatmul.mubr.f32.gmra.mrb[0].mxu0 %v533
    %v675 = vpop.f32.mrb[0].mxu0
    %v676 = vadd.f32 %v480, %v675
    %v677 = vpop.f32.mrb[0].mxu0
    %678 = vmatprep.mubr.f32.mxu0 0.0
    %679 = vmatmul.mubr.f32.gmra.mrb[0].mxu0 %v536
    %v680 = vpop.f32.mrb[0].mxu0
    %v681 = vadd.f32 %v485, %v680
    %v682 = vpop.f32.mrb[0].mxu0
    %683 = vmatprep.mubr.f32.mxu0 0.0
    %684 = vmatmul.mubr.f32.gmra.mrb[0].mxu0 %v539
    %v685 = vpop.f32.mrb[0].mxu0
    %v686 = vadd.f32 %v490, %v685
    %v687 = vpop.f32.mrb[0].mxu0
    %688 = vdwg.mxu0
    %s689 = scalar_lea.vmem [#allocation7], 256
    %v690 = vld [vmem:[%s689] sm:$0xff]
    %v691 = vld [vmem:[%s689 + $0x8] sm:$0xff]
    %v692 = vld [vmem:[%s689 + $0x10] sm:$0xff]
    %v693 = vld [vmem:[%s689 + $0x18] sm:$0xff]
    %v694 = vld [vmem:[%s689 + $0x20] sm:$0xff]
    %v695 = vld [vmem:[%s689 + $0x28] sm:$0xff]
    %v696 = vld [vmem:[%s689 + $0x30] sm:$0xff]
    %v697 = vld [vmem:[%s689 + $0x38] sm:$0xff]
    %v698 = vld [vmem:[%s689 + $0x40] sm:$0xff]
    %v699 = vld [vmem:[%s689 + $0x48] sm:$0xff]
    %v700 = vld [vmem:[%s689 + $0x50] sm:$0xff]
    %v701 = vld [vmem:[%s689 + $0x58] sm:$0xff]
    %v702 = vld [vmem:[%s689 + $0x60] sm:$0xff]
    %v703 = vld [vmem:[%s689 + $0x68] sm:$0xff]
    %v704 = vld [vmem:[%s689 + $0x70] sm:$0xff]
    %v705 = vld [vmem:[%s689 + $0x78] sm:$0xff]
    %v707 = vsel %vm295, %v690, 0
    %v710 = vsel %vm295, %v691, 0
    %v713 = vsel %vm295, %v692, 0
    %v716 = vsel %vm295, %v693, 0
    %v719 = vsel %vm295, %v694, 0
    %v722 = vsel %vm295, %v695, 0
    %v725 = vsel %vm295, %v696, 0
    %v728 = vsel %vm295, %v697, 0
    %v731 = vsel %vm295, %v698, 0
    %v734 = vsel %vm295, %v699, 0
    %v737 = vsel %vm295, %v700, 0
    %v740 = vsel %vm295, %v701, 0
    %v743 = vsel %vm295, %v702, 0
    %v746 = vsel %vm295, %v703, 0
    %v749 = vsel %vm295, %v704, 0
    %v752 = vsel %vm295, %v705, 0
    %v755 = vsel %vm344, %v256, 0
    %757 = vmatprep.subr.mxu0 0.0
    %758 = vmatpush1.msra.mxu0 %v755
    %759 = vmatprep.subr.mxu0 0.0
    %760 = vmatpush1.msra.mxu0 0.0
    %761 = vmatprep.subr.mxu0 0.0
    %762 = vmatpush1.msra.mxu0 0.0
    %763 = vmatprep.subr.mxu0 0.0
    %764 = vmatpush1.msra.mxu0 0.0
    %765 = vmatprep.subr.mxu0 0.0
    %766 = vmatpush1.msra.mxu0 0.0
    %767 = vmatprep.subr.mxu0 0.0
    %768 = vmatpush1.msra.mxu0 0.0
    %769 = vmatprep.subr.mxu0 0.0
    %770 = vmatpush1.msra.mxu0 0.0
    %771 = vmatprep.subr.mxu0 0.0
    %772 = vmatpush1.msra.mxu0 0.0
    %773 = vmatprep.subr.mxu0 0.0
    %774 = vmatpush1.msra.mxu0 0.0
    %775 = vmatprep.subr.mxu0 0.0
    %776 = vmatpush1.msra.mxu0 0.0
    %777 = vmatprep.subr.mxu0 0.0
    %778 = vmatpush1.msra.mxu0 0.0
    %779 = vmatprep.subr.mxu0 0.0
    %780 = vmatpush1.msra.mxu0 0.0
    %781 = vmatprep.subr.mxu0 0.0
    %782 = vmatpush1.msra.mxu0 0.0
    %783 = vmatprep.subr.mxu0 0.0
    %784 = vmatpush1.msra.mxu0 0.0
    %785 = vmatprep.subr.mxu0 0.0
    %786 = vmatpush1.msra.mxu0 0.0
    %787 = vmatprep.subr.mxu0 0.0
    %788 = vmatpush1.msra.mxu0 0.0
    %789 = vmatprep.subr.mxu0 0.0
    %790 = vmatpush1.msra.mxu0 0.0
    %791 = vmatprep.subr.mxu0 0.0
    %792 = vmatpush1.msra.mxu0 0.0
    %793 = vmatprep.subr.mxu0 0.0
    %794 = vmatpush1.msra.mxu0 0.0
    %795 = vmatprep.subr.mxu0 0.0
    %796 = vmatpush1.msra.mxu0 0.0
    %797 = vmatprep.subr.mxu0 0.0
    %798 = vmatpush1.msra.mxu0 0.0
    %799 = vmatprep.subr.mxu0 0.0
    %800 = vmatpush1.msra.mxu0 0.0
    %801 = vmatprep.subr.mxu0 0.0
    %802 = vmatpush1.msra.mxu0 0.0
    %803 = vmatprep.subr.mxu0 0.0
    %804 = vmatpush1.msra.mxu0 0.0
    %805 = vmatprep.subr.mxu0 0.0
    %806 = vmatpush1.msra.mxu0 0.0
    %807 = vmatprep.subr.mxu0 0.0
    %808 = vmatpush1.msra.mxu0 0.0
    %809 = vmatprep.subr.mxu0 0.0
    %810 = vmatpush1.msra.mxu0 0.0
    %811 = vmatprep.subr.mxu0 0.0
    %812 = vmatpush1.msra.mxu0 0.0
    %813 = vmatprep.subr.mxu0 0.0
    %814 = vmatpush1.msra.mxu0 0.0
    %815 = vmatprep.subr.mxu0 0.0
    %816 = vmatpush1.msra.mxu0 0.0
    %817 = vmatprep.subr.mxu0 0.0
    %818 = vmatpush1.msra.mxu0 0.0
    %819 = vmatprep.subr.mxu0 0.0
    %820 = vmatpush1.msra.mxu0 0.0
    %821 = vmatprep.mubr.f32.mxu0 0.0
    %822 = vmatmul.mubr.f32.gmra.mrb[0].mxu0 %v707
    %v823 = vpop.f32.mrb[0].mxu0
    %v824 = vadd.f32 0.0, %v823
    %v825 = vpop.f32.mrb[0].mxu0
    %826 = vmatprep.mubr.f32.mxu0 0.0
    %827 = vmatmul.mubr.f32.gmra.mrb[0].mxu0 %v710
    %v828 = vpop.f32.mrb[0].mxu0
    %v829 = vadd.f32 0.0, %v828
    %v830 = vpop.f32.mrb[0].mxu0
    %831 = vmatprep.mubr.f32.mxu0 0.0
    %832 = vmatmul.mubr.f32.gmra.mrb[0].mxu0 %v713
    %v833 = vpop.f32.mrb[0].mxu0
    %v834 = vadd.f32 0.0, %v833
    %v835 = vpop.f32.mrb[0].mxu0
    %836 = vmatprep.mubr.f32.mxu0 0.0
    %837 = vmatmul.mubr.f32.gmra.mrb[0].mxu0 %v716
    %v838 = vpop.f32.mrb[0].mxu0
    %v839 = vadd.f32 0.0, %v838
    %v840 = vpop.f32.mrb[0].mxu0
    %841 = vmatprep.mubr.f32.mxu0 0.0
    %842 = vmatmul.mubr.f32.gmra.mrb[0].mxu0 %v719
    %v843 = vpop.f32.mrb[0].mxu0
    %v844 = vadd.f32 0.0, %v843
    %v845 = vpop.f32.mrb[0].mxu0
    %846 = vmatprep.mubr.f32.mxu0 0.0
    %847 = vmatmul.mubr.f32.gmra.mrb[0].mxu0 %v722
    %v848 = vpop.f32.mrb[0].mxu0
    %v849 = vadd.f32 0.0, %v848
    %v850 = vpop.f32.mrb[0].mxu0
    %851 = vmatprep.mubr.f32.mxu0 0.0
    %852 = vmatmul.mubr.f32.gmra.mrb[0].mxu0 %v725
    %v853 = vpop.f32.mrb[0].mxu0
    %v854 = vadd.f32 0.0, %v853
    %v855 = vpop.f32.mrb[0].mxu0
    %856 = vmatprep.mubr.f32.mxu0 0.0
    %857 = vmatmul.mubr.f32.gmra.mrb[0].mxu0 %v728
    %v858 = vpop.f32.mrb[0].mxu0
    %v859 = vadd.f32 0.0, %v858
    %v860 = vpop.f32.mrb[0].mxu0
    %861 = vmatprep.mubr.f32.mxu0 0.0
    %862 = vmatmul.mubr.f32.gmra.mrb[0].mxu0 %v731
    %v863 = vpop.f32.mrb[0].mxu0
    %v864 = vadd.f32 0.0, %v863
    %v865 = vpop.f32.mrb[0].mxu0
    %866 = vmatprep.mubr.f32.mxu0 0.0
    %867 = vmatmul.mubr.f32.gmra.mrb[0].mxu0 %v734
    %v868 = vpop.f32.mrb[0].mxu0
    %v869 = vadd.f32 0.0, %v868
    %v870 = vpop.f32.mrb[0].mxu0
    %871 = vmatprep.mubr.f32.mxu0 0.0
    %872 = vmatmul.mubr.f32.gmra.mrb[0].mxu0 %v737
    %v873 = vpop.f32.mrb[0].mxu0
    %v874 = vadd.f32 0.0, %v873
    %v875 = vpop.f32.mrb[0].mxu0
    %876 = vmatprep.mubr.f32.mxu0 0.0
    %877 = vmatmul.mubr.f32.gmra.mrb[0].mxu0 %v740
    %v878 = vpop.f32.mrb[0].mxu0
    %v879 = vadd.f32 0.0, %v878
    %v880 = vpop.f32.mrb[0].mxu0
    %881 = vmatprep.mubr.f32.mxu0 0.0
    %882 = vmatmul.mubr.f32.gmra.mrb[0].mxu0 %v743
    %v883 = vpop.f32.mrb[0].mxu0
    %v884 = vadd.f32 0.0, %v883
    %v885 = vpop.f32.mrb[0].mxu0
    %886 = vmatprep.mubr.f32.mxu0 0.0
    %887 = vmatmul.mubr.f32.gmra.mrb[0].mxu0 %v746
    %v888 = vpop.f32.mrb[0].mxu0
    %v889 = vadd.f32 0.0, %v888
    %v890 = vpop.f32.mrb[0].mxu0
    %891 = vmatprep.mubr.f32.mxu0 0.0
    %892 = vmatmul.mubr.f32.gmra.mrb[0].mxu0 %v749
    %v893 = vpop.f32.mrb[0].mxu0
    %v894 = vadd.f32 0.0, %v893
    %v895 = vpop.f32.mrb[0].mxu0
    %896 = vmatprep.mubr.f32.mxu0 0.0
    %897 = vmatmul.mubr.f32.gmra.mrb[0].mxu0 %v752
    %v898 = vpop.f32.mrb[0].mxu0
    %v899 = vadd.f32 0.0, %v898
    %v900 = vpop.f32.mrb[0].mxu0
    %901 = vdwg.mxu0
    %v902 = vadd.f32 %v611, %v824
    %v903 = vadd.f32 %v616, %v829
    %v904 = vadd.f32 %v621, %v834
    %v905 = vadd.f32 %v626, %v839
    %v906 = vadd.f32 %v631, %v844
    %v907 = vadd.f32 %v636, %v849
    %v908 = vadd.f32 %v641, %v854
    %v909 = vadd.f32 %v646, %v859
    %v910 = vadd.f32 %v651, %v864
    %v911 = vadd.f32 %v656, %v869
    %v912 = vadd.f32 %v661, %v874
    %v913 = vadd.f32 %v666, %v879
    %v914 = vadd.f32 %v671, %v884
    %v915 = vadd.f32 %v676, %v889
    %v916 = vadd.f32 %v681, %v894
    %v917 = vadd.f32 %v686, %v899
    %v920 = vcombine.high %v259, %v259
    %v922 = vunpack.c.l.s4 1966171168
    %v923 = vunpack.c.0.s8 %v922
    %v924 = vlaneseq
    %v925 = vshrl.u32 %v924, 7
    %v926 = vsub.s32 %v923, %v925
    %v927 = vrot.slane %v259, %v926
    %v929 = vunpack.c.l.s4 1966171168
    %v930 = vunpack.c.0.s8 %v929
    %v931 = vlaneseq
    %v932 = vshrl.u32 %v931, 7
    %v933 = vsub.s32 %v930, %v932
    %v934 = vrot.slane %v920, %v933
    %v935 = vcombine.high %v927, %v927
    %v936 = vcombine.high %v934, %v934
    %v938 = vunpack.c.l.s4 1966171168
    %v939 = vunpack.c.0.s8 %v938
    %v940 = vlaneseq
    %v941 = vshrl.u32 %v940, 7
    %v942 = vsub.s32 %v939, %v941
    %v943 = vrot.slane %v927, %v942
    %v945 = vunpack.c.l.s4 1966171168
    %v946 = vunpack.c.0.s8 %v945
    %v947 = vlaneseq
    %v948 = vshrl.u32 %v947, 7
    %v949 = vsub.s32 %v946, %v948
    %v950 = vrot.slane %v934, %v949
    %v952 = vunpack.c.l.s4 1966171168
    %v953 = vunpack.c.0.s8 %v952
    %v954 = vlaneseq
    %v955 = vshrl.u32 %v954, 7
    %v956 = vsub.s32 %v953, %v955
    %v957 = vrot.slane %v935, %v956
    %v959 = vunpack.c.l.s4 1966171168
    %v960 = vunpack.c.0.s8 %v959
    %v961 = vlaneseq
    %v962 = vshrl.u32 %v961, 7
    %v963 = vsub.s32 %v960, %v962
    %v964 = vrot.slane %v936, %v963
    %v965 = vcombine.high %v943, %v943
    %v966 = vcombine.high %v950, %v950
    %v967 = vcombine.high %v957, %v957
    %v968 = vcombine.high %v964, %v964
    %v969 = vcombine.high %v260, %v260
    %v971 = vunpack.c.l.s4 1966171168
    %v972 = vunpack.c.0.s8 %v971
    %v973 = vlaneseq
    %v974 = vshrl.u32 %v973, 7
    %v975 = vsub.s32 %v972, %v974
    %v976 = vrot.slane %v260, %v975
    %v978 = vunpack.c.l.s4 1966171168
    %v979 = vunpack.c.0.s8 %v978
    %v980 = vlaneseq
    %v981 = vshrl.u32 %v980, 7
    %v982 = vsub.s32 %v979, %v981
    %v983 = vrot.slane %v969, %v982
    %v984 = vcombine.high %v976, %v976
    %v985 = vcombine.high %v983, %v983
    %v987 = vunpack.c.l.s4 1966171168
    %v988 = vunpack.c.0.s8 %v987
    %v989 = vlaneseq
    %v990 = vshrl.u32 %v989, 7
    %v991 = vsub.s32 %v988, %v990
    %v992 = vrot.slane %v976, %v991
    %v994 = vunpack.c.l.s4 1966171168
    %v995 = vunpack.c.0.s8 %v994
    %v996 = vlaneseq
    %v997 = vshrl.u32 %v996, 7
    %v998 = vsub.s32 %v995, %v997
    %v999 = vrot.slane %v983, %v998
    %v1001 = vunpack.c.l.s4 1966171168
    %v1002 = vunpack.c.0.s8 %v1001
    %v1003 = vlaneseq
    %v1004 = vshrl.u32 %v1003, 7
    %v1005 = vsub.s32 %v1002, %v1004
    %v1006 = vrot.slane %v984, %v1005
    %v1008 = vunpack.c.l.s4 1966171168
    %v1009 = vunpack.c.0.s8 %v1008
    %v1010 = vlaneseq
    %v1011 = vshrl.u32 %v1010, 7
    %v1012 = vsub.s32 %v1009, %v1011
    %v1013 = vrot.slane %v985, %v1012
    %v1014 = vcombine.high %v992, %v992
    %v1015 = vcombine.high %v999, %v999
    %v1016 = vcombine.high %v1006, %v1006
    %v1017 = vcombine.high %v1013, %v1013
    %v1018 = vlaneseq
    %v1019 = vshrl.u32 %v1018, 7
    %v1020 = vsub.s32 0, %v1019
    %v1021 = vrot.slane %v943, %v1020
    %v1022 = vlaneseq
    %v1023 = vshrl.u32 %v1022, 7
    %v1024 = vsub.s32 0, %v1023
    %v1025 = vrot.slane %v957, %v1024
    %v1026 = vlaneseq
    %v1027 = vshrl.u32 %v1026, 7
    %v1028 = vsub.s32 0, %v1027
    %v1029 = vrot.slane %v965, %v1028
    %v1030 = vlaneseq
    %v1031 = vshrl.u32 %v1030, 7
    %v1032 = vsub.s32 0, %v1031
    %v1033 = vrot.slane %v967, %v1032
    %v1034 = vlaneseq
    %v1035 = vshrl.u32 %v1034, 7
    %v1036 = vsub.s32 0, %v1035
    %v1037 = vrot.slane %v950, %v1036
    %v1038 = vlaneseq
    %v1039 = vshrl.u32 %v1038, 7
    %v1040 = vsub.s32 0, %v1039
    %v1041 = vrot.slane %v964, %v1040
    %v1042 = vlaneseq
    %v1043 = vshrl.u32 %v1042, 7
    %v1044 = vsub.s32 0, %v1043
    %v1045 = vrot.slane %v966, %v1044
    %v1046 = vlaneseq
    %v1047 = vshrl.u32 %v1046, 7
    %v1048 = vsub.s32 0, %v1047
    %v1049 = vrot.slane %v968, %v1048
    %v1050 = vlaneseq
    %v1051 = vshrl.u32 %v1050, 7
    %v1052 = vsub.s32 0, %v1051
    %v1053 = vrot.slane %v992, %v1052
    %v1054 = vlaneseq
    %v1055 = vshrl.u32 %v1054, 7
    %v1056 = vsub.s32 0, %v1055
    %v1057 = vrot.slane %v1006, %v1056
    %v1058 = vlaneseq
    %v1059 = vshrl.u32 %v1058, 7
    %v1060 = vsub.s32 0, %v1059
    %v1061 = vrot.slane %v1014, %v1060
    %v1062 = vlaneseq
    %v1063 = vshrl.u32 %v1062, 7
    %v1064 = vsub.s32 0, %v1063
    %v1065 = vrot.slane %v1016, %v1064
    %v1066 = vlaneseq
    %v1067 = vshrl.u32 %v1066, 7
    %v1068 = vsub.s32 0, %v1067
    %v1069 = vrot.slane %v999, %v1068
    %v1070 = vlaneseq
    %v1071 = vshrl.u32 %v1070, 7
    %v1072 = vsub.s32 0, %v1071
    %v1073 = vrot.slane %v1013, %v1072
    %v1074 = vlaneseq
    %v1075 = vshrl.u32 %v1074, 7
    %v1076 = vsub.s32 0, %v1075
    %v1077 = vrot.slane %v1015, %v1076
    %v1078 = vlaneseq
    %v1079 = vshrl.u32 %v1078, 7
    %v1080 = vsub.s32 0, %v1079
    %v1081 = vrot.slane %v1017, %v1080
    %v1098 = vmul.f32 %v902, %v1021
    %v1099 = vmul.f32 %v903, %v1025
    %v1100 = vmul.f32 %v904, %v1029
    %v1101 = vmul.f32 %v905, %v1033
    %v1102 = vmul.f32 %v906, %v1037
    %v1103 = vmul.f32 %v907, %v1041
    %v1104 = vmul.f32 %v908, %v1045
    %v1105 = vmul.f32 %v909, %v1049
    %v1106 = vmul.f32 %v910, %v1053
    %v1107 = vmul.f32 %v911, %v1057
    %v1108 = vmul.f32 %v912, %v1061
    %v1109 = vmul.f32 %v913, %v1065
    %v1110 = vmul.f32 %v914, %v1069
    %v1111 = vmul.f32 %v915, %v1073
    %v1112 = vmul.f32 %v916, %v1077
    %v1113 = vmul.f32 %v917, %v1081
    %v1114 = vadd.f32 %v1098, %v1099
    %v1115 = vadd.f32 %v1114, %v1100
    %v1116 = vadd.f32 %v1115, %v1101
    %v1117 = vadd.f32 %v1116, %v1102
    %v1118 = vadd.f32 %v1117, %v1103
    %v1119 = vadd.f32 %v1118, %v1104
    %v1120 = vadd.f32 %v1119, %v1105
    %v1121 = vadd.f32 %v1120, %v1106
    %v1122 = vadd.f32 %v1121, %v1107
    %v1123 = vadd.f32 %v1122, %v1108
    %v1124 = vadd.f32 %v1123, %v1109
    %v1125 = vadd.f32 %v1124, %v1110
    %v1126 = vadd.f32 %v1125, %v1111
    %v1127 = vadd.f32 %v1126, %v1112
    %v1128 = vadd.f32 %v1127, %v1113
    %v1129 = vadd.f32 %v1128, %v261
    %1130 = vst [vmem:[#allocation11] sm:$0xff] %v1129
    %v1131 = vld [vmem:[#allocation7] sm:$0xff]
    %v1132 = vld [vmem:[#allocation7 + $0x8] sm:$0xff]
    %v1133 = vld [vmem:[#allocation7 + $0x10] sm:$0xff]
    %v1134 = vld [vmem:[#allocation7 + $0x18] sm:$0xff]
    %v1135 = vld [vmem:[#allocation7 + $0x20] sm:$0xff]
    %v1136 = vld [vmem:[#allocation7 + $0x28] sm:$0xff]
    %v1137 = vld [vmem:[#allocation7 + $0x30] sm:$0xff]
    %v1138 = vld [vmem:[#allocation7 + $0x38] sm:$0xff]
    %v1139 = vld [vmem:[#allocation7 + $0x40] sm:$0xff]
    %v1140 = vld [vmem:[#allocation7 + $0x48] sm:$0xff]
    %v1141 = vld [vmem:[#allocation7 + $0x50] sm:$0xff]
    %v1142 = vld [vmem:[#allocation7 + $0x58] sm:$0xff]
    %v1143 = vld [vmem:[#allocation7 + $0x60] sm:$0xff]
    %v1144 = vld [vmem:[#allocation7 + $0x68] sm:$0xff]
    %v1145 = vld [vmem:[#allocation7 + $0x70] sm:$0xff]
    %v1146 = vld [vmem:[#allocation7 + $0x78] sm:$0xff]
    %v1147 = vld [vmem:[%s278] sm:$0xff]
    %v1148 = vld [vmem:[%s278 + $0x8] sm:$0xff]
    %v1149 = vld [vmem:[%s278 + $0x10] sm:$0xff]
    %v1150 = vld [vmem:[%s278 + $0x18] sm:$0xff]
    %v1151 = vld [vmem:[%s278 + $0x20] sm:$0xff]
    %v1152 = vld [vmem:[%s278 + $0x28] sm:$0xff]
    %v1153 = vld [vmem:[%s278 + $0x30] sm:$0xff]
    %v1154 = vld [vmem:[%s278 + $0x38] sm:$0xff]
    %v1155 = vld [vmem:[%s278 + $0x40] sm:$0xff]
    %v1156 = vld [vmem:[%s278 + $0x48] sm:$0xff]
    %v1157 = vld [vmem:[%s278 + $0x50] sm:$0xff]
    %v1158 = vld [vmem:[%s278 + $0x58] sm:$0xff]
    %v1159 = vld [vmem:[%s278 + $0x60] sm:$0xff]
    %v1160 = vld [vmem:[%s278 + $0x68] sm:$0xff]
    %v1161 = vld [vmem:[%s278 + $0x70] sm:$0xff]
    %v1162 = vld [vmem:[%s278 + $0x78] sm:$0xff]
    %v1163 = vrot.slane %v169, 4
    %v1165 = vsel %vm295, %v1147, 0
    %v1168 = vsel %vm295, %v1148, 0
    %v1171 = vsel %vm295, %v1149, 0
    %v1174 = vsel %vm295, %v1150, 0
    %v1177 = vsel %vm295, %v1151, 0
    %v1180 = vsel %vm295, %v1152, 0
    %v1183 = vsel %vm295, %v1153, 0
    %v1186 = vsel %vm295, %v1154, 0
    %v1189 = vsel %vm295, %v1155, 0
    %v1192 = vsel %vm295, %v1156, 0
    %v1195 = vsel %vm295, %v1157, 0
    %v1198 = vsel %vm295, %v1158, 0
    %v1201 = vsel %vm295, %v1159, 0
    %v1204 = vsel %vm295, %v1160, 0
    %v1207 = vsel %vm295, %v1161, 0
    %v1210 = vsel %vm295, %v1162, 0
    %v1212 = vsel %vm344, %v1163, 0
    %1214 = vmatprep.subr.mxu0 0.0
    %1215 = vmatpush1.msra.mxu0 %v1212
    %1216 = vmatprep.subr.mxu0 0.0
    %1217 = vmatpush1.msra.mxu0 0.0
    %1218 = vmatprep.subr.mxu0 0.0
    %1219 = vmatpush1.msra.mxu0 0.0
    %1220 = vmatprep.subr.mxu0 0.0
    %1221 = vmatpush1.msra.mxu0 0.0
    %1222 = vmatprep.subr.mxu0 0.0
    %1223 = vmatpush1.msra.mxu0 0.0
    %1224 = vmatprep.subr.mxu0 0.0
    %1225 = vmatpush1.msra.mxu0 0.0
    %1226 = vmatprep.subr.mxu0 0.0
    %1227 = vmatpush1.msra.mxu0 0.0
    %1228 = vmatprep.subr.mxu0 0.0
    %1229 = vmatpush1.msra.mxu0 0.0
    %1230 = vmatprep.subr.mxu0 0.0
    %1231 = vmatpush1.msra.mxu0 0.0
    %1232 = vmatprep.subr.mxu0 0.0
    %1233 = vmatpush1.msra.mxu0 0.0
    %1234 = vmatprep.subr.mxu0 0.0
    %1235 = vmatpush1.msra.mxu0 0.0
    %1236 = vmatprep.subr.mxu0 0.0
    %1237 = vmatpush1.msra.mxu0 0.0
    %1238 = vmatprep.subr.mxu0 0.0
    %1239 = vmatpush1.msra.mxu0 0.0
    %1240 = vmatprep.subr.mxu0 0.0
    %1241 = vmatpush1.msra.mxu0 0.0
    %1242 = vmatprep.subr.mxu0 0.0
    %1243 = vmatpush1.msra.mxu0 0.0
    %1244 = vmatprep.subr.mxu0 0.0
    %1245 = vmatpush1.msra.mxu0 0.0
    %1246 = vmatprep.subr.mxu0 0.0
    %1247 = vmatpush1.msra.mxu0 0.0
    %1248 = vmatprep.subr.mxu0 0.0
    %1249 = vmatpush1.msra.mxu0 0.0
    %1250 = vmatprep.subr.mxu0 0.0
    %1251 = vmatpush1.msra.mxu0 0.0
    %1252 = vmatprep.subr.mxu0 0.0
    %1253 = vmatpush1.msra.mxu0 0.0
    %1254 = vmatprep.subr.mxu0 0.0
    %1255 = vmatpush1.msra.mxu0 0.0
    %1256 = vmatprep.subr.mxu0 0.0
    %1257 = vmatpush1.msra.mxu0 0.0
    %1258 = vmatprep.subr.mxu0 0.0
    %1259 = vmatpush1.msra.mxu0 0.0
    %1260 = vmatprep.subr.mxu0 0.0
    %1261 = vmatpush1.msra.mxu0 0.0
    %1262 = vmatprep.subr.mxu0 0.0
    %1263 = vmatpush1.msra.mxu0 0.0
    %1264 = vmatprep.subr.mxu0 0.0
    %1265 = vmatpush1.msra.mxu0 0.0
    %1266 = vmatprep.subr.mxu0 0.0
    %1267 = vmatpush1.msra.mxu0 0.0
    %1268 = vmatprep.subr.mxu0 0.0
    %1269 = vmatpush1.msra.mxu0 0.0
    %1270 = vmatprep.subr.mxu0 0.0
    %1271 = vmatpush1.msra.mxu0 0.0
    %1272 = vmatprep.subr.mxu0 0.0
    %1273 = vmatpush1.msra.mxu0 0.0
    %1274 = vmatprep.subr.mxu0 0.0
    %1275 = vmatpush1.msra.mxu0 0.0
    %1276 = vmatprep.subr.mxu0 0.0
    %1277 = vmatpush1.msra.mxu0 0.0
    %1278 = vmatprep.mubr.f32.mxu0 0.0
    %1279 = vmatmul.mubr.f32.gmra.mrb[0].mxu0 %v1165
    %v1280 = vpop.f32.mrb[0].mxu0
    %v1281 = vadd.f32 0.0, %v1280
    %v1282 = vpop.f32.mrb[0].mxu0
    %1283 = vmatprep.mubr.f32.mxu0 0.0
    %1284 = vmatmul.mubr.f32.gmra.mrb[0].mxu0 %v1168
    %v1285 = vpop.f32.mrb[0].mxu0
    %v1286 = vadd.f32 0.0, %v1285
    %v1287 = vpop.f32.mrb[0].mxu0
    %1288 = vmatprep.mubr.f32.mxu0 0.0
    %1289 = vmatmul.mubr.f32.gmra.mrb[0].mxu0 %v1171
    %v1290 = vpop.f32.mrb[0].mxu0
    %v1291 = vadd.f32 0.0, %v1290
    %v1292 = vpop.f32.mrb[0].mxu0
    %1293 = vmatprep.mubr.f32.mxu0 0.0
    %1294 = vmatmul.mubr.f32.gmra.mrb[0].mxu0 %v1174
    %v1295 = vpop.f32.mrb[0].mxu0
    %v1296 = vadd.f32 0.0, %v1295
    %v1297 = vpop.f32.mrb[0].mxu0
    %1298 = vmatprep.mubr.f32.mxu0 0.0
    %1299 = vmatmul.mubr.f32.gmra.mrb[0].mxu0 %v1177
    %v1300 = vpop.f32.mrb[0].mxu0
    %v1301 = vadd.f32 0.0, %v1300
    %v1302 = vpop.f32.mrb[0].mxu0
    %1303 = vmatprep.mubr.f32.mxu0 0.0
    %1304 = vmatmul.mubr.f32.gmra.mrb[0].mxu0 %v1180
    %v1305 = vpop.f32.mrb[0].mxu0
    %v1306 = vadd.f32 0.0, %v1305
    %v1307 = vpop.f32.mrb[0].mxu0
    %1308 = vmatprep.mubr.f32.mxu0 0.0
    %1309 = vmatmul.mubr.f32.gmra.mrb[0].mxu0 %v1183
    %v1310 = vpop.f32.mrb[0].mxu0
    %v1311 = vadd.f32 0.0, %v1310
    %v1312 = vpop.f32.mrb[0].mxu0
    %1313 = vmatprep.mubr.f32.mxu0 0.0
    %1314 = vmatmul.mubr.f32.gmra.mrb[0].mxu0 %v1186
    %v1315 = vpop.f32.mrb[0].mxu0
    %v1316 = vadd.f32 0.0, %v1315
    %v1317 = vpop.f32.mrb[0].mxu0
    %1318 = vmatprep.mubr.f32.mxu0 0.0
    %1319 = vmatmul.mubr.f32.gmra.mrb[0].mxu0 %v1189
    %v1320 = vpop.f32.mrb[0].mxu0
    %v1321 = vadd.f32 0.0, %v1320
    %v1322 = vpop.f32.mrb[0].mxu0
    %1323 = vmatprep.mubr.f32.mxu0 0.0
    %1324 = vmatmul.mubr.f32.gmra.mrb[0].mxu0 %v1192
    %v1325 = vpop.f32.mrb[0].mxu0
    %v1326 = vadd.f32 0.0, %v1325
    %v1327 = vpop.f32.mrb[0].mxu0
    %1328 = vmatprep.mubr.f32.mxu0 0.0
    %1329 = vmatmul.mubr.f32.gmra.mrb[0].mxu0 %v1195
    %v1330 = vpop.f32.mrb[0].mxu0
    %v1331 = vadd.f32 0.0, %v1330
    %v1332 = vpop.f32.mrb[0].mxu0
    %1333 = vmatprep.mubr.f32.mxu0 0.0
    %1334 = vmatmul.mubr.f32.gmra.mrb[0].mxu0 %v1198
    %v1335 = vpop.f32.mrb[0].mxu0
    %v1336 = vadd.f32 0.0, %v1335
    %v1337 = vpop.f32.mrb[0].mxu0
    %1338 = vmatprep.mubr.f32.mxu0 0.0
    %1339 = vmatmul.mubr.f32.gmra.mrb[0].mxu0 %v1201
    %v1340 = vpop.f32.mrb[0].mxu0
    %v1341 = vadd.f32 0.0, %v1340
    %v1342 = vpop.f32.mrb[0].mxu0
    %1343 = vmatprep.mubr.f32.mxu0 0.0
    %1344 = vmatmul.mubr.f32.gmra.mrb[0].mxu0 %v1204
    %v1345 = vpop.f32.mrb[0].mxu0
    %v1346 = vadd.f32 0.0, %v1345
    %v1347 = vpop.f32.mrb[0].mxu0
    %1348 = vmatprep.mubr.f32.mxu0 0.0
    %1349 = vmatmul.mubr.f32.gmra.mrb[0].mxu0 %v1207
    %v1350 = vpop.f32.mrb[0].mxu0
    %v1351 = vadd.f32 0.0, %v1350
    %v1352 = vpop.f32.mrb[0].mxu0
    %1353 = vmatprep.mubr.f32.mxu0 0.0
    %1354 = vmatmul.mubr.f32.gmra.mrb[0].mxu0 %v1210
    %v1355 = vpop.f32.mrb[0].mxu0
    %v1356 = vadd.f32 0.0, %v1355
    %v1357 = vpop.f32.mrb[0].mxu0
    %1358 = vdwg.mxu0
    %v1359 = vrot.slane %v85, 4
    %v1361 = vsel %vm295, %v1131, 0
    %v1364 = vsel %vm295, %v1132, 0
    %v1367 = vsel %vm295, %v1133, 0
    %v1370 = vsel %vm295, %v1134, 0
    %v1373 = vsel %vm295, %v1135, 0
    %v1376 = vsel %vm295, %v1136, 0
    %v1379 = vsel %vm295, %v1137, 0
    %v1382 = vsel %vm295, %v1138, 0
    %v1385 = vsel %vm295, %v1139, 0
    %v1388 = vsel %vm295, %v1140, 0
    %v1391 = vsel %vm295, %v1141, 0
    %v1394 = vsel %vm295, %v1142, 0
    %v1397 = vsel %vm295, %v1143, 0
    %v1400 = vsel %vm295, %v1144, 0
    %v1403 = vsel %vm295, %v1145, 0
    %v1406 = vsel %vm295, %v1146, 0
    %v1408 = vsel %vm344, %v1359, 0
    %1410 = vmatprep.subr.mxu0 0.0
    %1411 = vmatpush1.msra.mxu0 %v1408
    %1412 = vmatprep.subr.mxu0 0.0
    %1413 = vmatpush1.msra.mxu0 0.0
    %1414 = vmatprep.subr.mxu0 0.0
    %1415 = vmatpush1.msra.mxu0 0.0
    %1416 = vmatprep.subr.mxu0 0.0
    %1417 = vmatpush1.msra.mxu0 0.0
    %1418 = vmatprep.subr.mxu0 0.0
    %1419 = vmatpush1.msra.mxu0 0.0
    %1420 = vmatprep.subr.mxu0 0.0
    %1421 = vmatpush1.msra.mxu0 0.0
    %1422 = vmatprep.subr.mxu0 0.0
    %1423 = vmatpush1.msra.mxu0 0.0
    %1424 = vmatprep.subr.mxu0 0.0
    %1425 = vmatpush1.msra.mxu0 0.0
    %1426 = vmatprep.subr.mxu0 0.0
    %1427 = vmatpush1.msra.mxu0 0.0
    %1428 = vmatprep.subr.mxu0 0.0
    %1429 = vmatpush1.msra.mxu0 0.0
    %1430 = vmatprep.subr.mxu0 0.0
    %1431 = vmatpush1.msra.mxu0 0.0
    %1432 = vmatprep.subr.mxu0 0.0
    %1433 = vmatpush1.msra.mxu0 0.0
    %1434 = vmatprep.subr.mxu0 0.0
    %1435 = vmatpush1.msra.mxu0 0.0
    %1436 = vmatprep.subr.mxu0 0.0
    %1437 = vmatpush1.msra.mxu0 0.0
    %1438 = vmatprep.subr.mxu0 0.0
    %1439 = vmatpush1.msra.mxu0 0.0
    %1440 = vmatprep.subr.mxu0 0.0
    %1441 = vmatpush1.msra.mxu0 0.0
    %1442 = vmatprep.subr.mxu0 0.0
    %1443 = vmatpush1.msra.mxu0 0.0
    %1444 = vmatprep.subr.mxu0 0.0
    %1445 = vmatpush1.msra.mxu0 0.0
    %1446 = vmatprep.subr.mxu0 0.0
    %1447 = vmatpush1.msra.mxu0 0.0
    %1448 = vmatprep.subr.mxu0 0.0
    %1449 = vmatpush1.msra.mxu0 0.0
    %1450 = vmatprep.subr.mxu0 0.0
    %1451 = vmatpush1.msra.mxu0 0.0
    %1452 = vmatprep.subr.mxu0 0.0
    %1453 = vmatpush1.msra.mxu0 0.0
    %1454 = vmatprep.subr.mxu0 0.0
    %1455 = vmatpush1.msra.mxu0 0.0
    %1456 = vmatprep.subr.mxu0 0.0
    %1457 = vmatpush1.msra.mxu0 0.0
    %1458 = vmatprep.subr.mxu0 0.0
    %1459 = vmatpush1.msra.mxu0 0.0
    %1460 = vmatprep.subr.mxu0 0.0
    %1461 = vmatpush1.msra.mxu0 0.0
    %1462 = vmatprep.subr.mxu0 0.0
    %1463 = vmatpush1.msra.mxu0 0.0
    %1464 = vmatprep.subr.mxu0 0.0
    %1465 = vmatpush1.msra.mxu0 0.0
    %1466 = vmatprep.subr.mxu0 0.0
    %1467 = vmatpush1.msra.mxu0 0.0
    %1468 = vmatprep.subr.mxu0 0.0
    %1469 = vmatpush1.msra.mxu0 0.0
    %1470 = vmatprep.subr.mxu0 0.0
    %1471 = vmatpush1.msra.mxu0 0.0
    %1472 = vmatprep.subr.mxu0 0.0
    %1473 = vmatpush1.msra.mxu0 0.0
    %1474 = vmatprep.mubr.f32.mxu0 0.0
    %1475 = vmatmul.mubr.f32.gmra.mrb[0].mxu0 %v1361
    %v1476 = vpop.f32.mrb[0].mxu0
    %v1477 = vadd.f32 %v1281, %v1476
    %v1478 = vpop.f32.mrb[0].mxu0
    %1479 = vmatprep.mubr.f32.mxu0 0.0
    %1480 = vmatmul.mubr.f32.gmra.mrb[0].mxu0 %v1364
    %v1481 = vpop.f32.mrb[0].mxu0
    %v1482 = vadd.f32 %v1286, %v1481
    %v1483 = vpop.f32.mrb[0].mxu0
    %1484 = vmatprep.mubr.f32.mxu0 0.0
    %1485 = vmatmul.mubr.f32.gmra.mrb[0].mxu0 %v1367
    %v1486 = vpop.f32.mrb[0].mxu0
    %v1487 = vadd.f32 %v1291, %v1486
    %v1488 = vpop.f32.mrb[0].mxu0
    %1489 = vmatprep.mubr.f32.mxu0 0.0
    %1490 = vmatmul.mubr.f32.gmra.mrb[0].mxu0 %v1370
    %v1491 = vpop.f32.mrb[0].mxu0
    %v1492 = vadd.f32 %v1296, %v1491
    %v1493 = vpop.f32.mrb[0].mxu0
    %1494 = vmatprep.mubr.f32.mxu0 0.0
    %1495 = vmatmul.mubr.f32.gmra.mrb[0].mxu0 %v1373
    %v1496 = vpop.f32.mrb[0].mxu0
    %v1497 = vadd.f32 %v1301, %v1496
    %v1498 = vpop.f32.mrb[0].mxu0
    %1499 = vmatprep.mubr.f32.mxu0 0.0
    %1500 = vmatmul.mubr.f32.gmra.mrb[0].mxu0 %v1376
    %v1501 = vpop.f32.mrb[0].mxu0
    %v1502 = vadd.f32 %v1306, %v1501
    %v1503 = vpop.f32.mrb[0].mxu0
    %1504 = vmatprep.mubr.f32.mxu0 0.0
    %1505 = vmatmul.mubr.f32.gmra.mrb[0].mxu0 %v1379
    %v1506 = vpop.f32.mrb[0].mxu0
    %v1507 = vadd.f32 %v1311, %v1506
    %v1508 = vpop.f32.mrb[0].mxu0
    %1509 = vmatprep.mubr.f32.mxu0 0.0
    %1510 = vmatmul.mubr.f32.gmra.mrb[0].mxu0 %v1382
    %v1511 = vpop.f32.mrb[0].mxu0
    %v1512 = vadd.f32 %v1316, %v1511
    %v1513 = vpop.f32.mrb[0].mxu0
    %1514 = vmatprep.mubr.f32.mxu0 0.0
    %1515 = vmatmul.mubr.f32.gmra.mrb[0].mxu0 %v1385
    %v1516 = vpop.f32.mrb[0].mxu0
    %v1517 = vadd.f32 %v1321, %v1516
    %v1518 = vpop.f32.mrb[0].mxu0
    %1519 = vmatprep.mubr.f32.mxu0 0.0
    %1520 = vmatmul.mubr.f32.gmra.mrb[0].mxu0 %v1388
    %v1521 = vpop.f32.mrb[0].mxu0
    %v1522 = vadd.f32 %v1326, %v1521
    %v1523 = vpop.f32.mrb[0].mxu0
    %1524 = vmatprep.mubr.f32.mxu0 0.0
    %1525 = vmatmul.mubr.f32.gmra.mrb[0].mxu0 %v1391
    %v1526 = vpop.f32.mrb[0].mxu0
    %v1527 = vadd.f32 %v1331, %v1526
    %v1528 = vpop.f32.mrb[0].mxu0
    %1529 = vmatprep.mubr.f32.mxu0 0.0
    %1530 = vmatmul.mubr.f32.gmra.mrb[0].mxu0 %v1394
    %v1531 = vpop.f32.mrb[0].mxu0
    %v1532 = vadd.f32 %v1336, %v1531
    %v1533 = vpop.f32.mrb[0].mxu0
    %1534 = vmatprep.mubr.f32.mxu0 0.0
    %1535 = vmatmul.mubr.f32.gmra.mrb[0].mxu0 %v1397
    %v1536 = vpop.f32.mrb[0].mxu0
    %v1537 = vadd.f32 %v1341, %v1536
    %v1538 = vpop.f32.mrb[0].mxu0
    %1539 = vmatprep.mubr.f32.mxu0 0.0
    %1540 = vmatmul.mubr.f32.gmra.mrb[0].mxu0 %v1400
    %v1541 = vpop.f32.mrb[0].mxu0
    %v1542 = vadd.f32 %v1346, %v1541
    %v1543 = vpop.f32.mrb[0].mxu0
    %1544 = vmatprep.mubr.f32.mxu0 0.0
    %1545 = vmatmul.mubr.f32.gmra.mrb[0].mxu0 %v1403
    %v1546 = vpop.f32.mrb[0].mxu0
    %v1547 = vadd.f32 %v1351, %v1546
    %v1548 = vpop.f32.mrb[0].mxu0
    %1549 = vmatprep.mubr.f32.mxu0 0.0
    %1550 = vmatmul.mubr.f32.gmra.mrb[0].mxu0 %v1406
    %v1551 = vpop.f32.mrb[0].mxu0
    %v1552 = vadd.f32 %v1356, %v1551
    %v1553 = vpop.f32.mrb[0].mxu0
    %1554 = vdwg.mxu0
    %v1555 = vld [vmem:[%s689] sm:$0xff]
    %v1556 = vld [vmem:[%s689 + $0x8] sm:$0xff]
    %v1557 = vld [vmem:[%s689 + $0x10] sm:$0xff]
    %v1558 = vld [vmem:[%s689 + $0x18] sm:$0xff]
    %v1559 = vld [vmem:[%s689 + $0x20] sm:$0xff]
    %v1560 = vld [vmem:[%s689 + $0x28] sm:$0xff]
    %v1561 = vld [vmem:[%s689 + $0x30] sm:$0xff]
    %v1562 = vld [vmem:[%s689 + $0x38] sm:$0xff]
    %v1563 = vld [vmem:[%s689 + $0x40] sm:$0xff]
    %v1564 = vld [vmem:[%s689 + $0x48] sm:$0xff]
    %v1565 = vld [vmem:[%s689 + $0x50] sm:$0xff]
    %v1566 = vld [vmem:[%s689 + $0x58] sm:$0xff]
    %v1567 = vld [vmem:[%s689 + $0x60] sm:$0xff]
    %v1568 = vld [vmem:[%s689 + $0x68] sm:$0xff]
    %v1569 = vld [vmem:[%s689 + $0x70] sm:$0xff]
    %v1570 = vld [vmem:[%s689 + $0x78] sm:$0xff]
    %v1571 = vrot.slane %v256, 4
    %v1573 = vsel %vm295, %v1555, 0
    %v1576 = vsel %vm295, %v1556, 0
    %v1579 = vsel %vm295, %v1557, 0
    %v1582 = vsel %vm295, %v1558, 0
    %v1585 = vsel %vm295, %v1559, 0
    %v1588 = vsel %vm295, %v1560, 0
    %v1591 = vsel %vm295, %v1561, 0
    %v1594 = vsel %vm295, %v1562, 0
    %v1597 = vsel %vm295, %v1563, 0
    %v1600 = vsel %vm295, %v1564, 0
    %v1603 = vsel %vm295, %v1565, 0
    %v1606 = vsel %vm295, %v1566, 0
    %v1609 = vsel %vm295, %v1567, 0
    %v1612 = vsel %vm295, %v1568, 0
    %v1615 = vsel %vm295, %v1569, 0
    %v1618 = vsel %vm295, %v1570, 0
    %v1620 = vsel %vm344, %v1571, 0
    %1622 = vmatprep.subr.mxu0 0.0
    %1623 = vmatpush1.msra.mxu0 %v1620
    %1624 = vmatprep.subr.mxu0 0.0
    %1625 = vmatpush1.msra.mxu0 0.0
    %1626 = vmatprep.subr.mxu0 0.0
    %1627 = vmatpush1.msra.mxu0 0.0
    %1628 = vmatprep.subr.mxu0 0.0
    %1629 = vmatpush1.msra.mxu0 0.0
    %1630 = vmatprep.subr.mxu0 0.0
    %1631 = vmatpush1.msra.mxu0 0.0
    %1632 = vmatprep.subr.mxu0 0.0
    %1633 = vmatpush1.msra.mxu0 0.0
    %1634 = vmatprep.subr.mxu0 0.0
    %1635 = vmatpush1.msra.mxu0 0.0
    %1636 = vmatprep.subr.mxu0 0.0
    %1637 = vmatpush1.msra.mxu0 0.0
    %1638 = vmatprep.subr.mxu0 0.0
    %1639 = vmatpush1.msra.mxu0 0.0
    %1640 = vmatprep.subr.mxu0 0.0
    %1641 = vmatpush1.msra.mxu0 0.0
    %1642 = vmatprep.subr.mxu0 0.0
    %1643 = vmatpush1.msra.mxu0 0.0
    %1644 = vmatprep.subr.mxu0 0.0
    %1645 = vmatpush1.msra.mxu0 0.0
    %1646 = vmatprep.subr.mxu0 0.0
    %1647 = vmatpush1.msra.mxu0 0.0
    %1648 = vmatprep.subr.mxu0 0.0
    %1649 = vmatpush1.msra.mxu0 0.0
    %1650 = vmatprep.subr.mxu0 0.0
    %1651 = vmatpush1.msra.mxu0 0.0
    %1652 = vmatprep.subr.mxu0 0.0
    %1653 = vmatpush1.msra.mxu0 0.0
    %1654 = vmatprep.subr.mxu0 0.0
    %1655 = vmatpush1.msra.mxu0 0.0
    %1656 = vmatprep.subr.mxu0 0.0
    %1657 = vmatpush1.msra.mxu0 0.0
    %1658 = vmatprep.subr.mxu0 0.0
    %1659 = vmatpush1.msra.mxu0 0.0
    %1660 = vmatprep.subr.mxu0 0.0
    %1661 = vmatpush1.msra.mxu0 0.0
    %1662 = vmatprep.subr.mxu0 0.0
    %1663 = vmatpush1.msra.mxu0 0.0
    %1664 = vmatprep.subr.mxu0 0.0
    %1665 = vmatpush1.msra.mxu0 0.0
    %1666 = vmatprep.subr.mxu0 0.0
    %1667 = vmatpush1.msra.mxu0 0.0
    %1668 = vmatprep.subr.mxu0 0.0
    %1669 = vmatpush1.msra.mxu0 0.0
    %1670 = vmatprep.subr.mxu0 0.0
    %1671 = vmatpush1.msra.mxu0 0.0
    %1672 = vmatprep.subr.mxu0 0.0
    %1673 = vmatpush1.msra.mxu0 0.0
    %1674 = vmatprep.subr.mxu0 0.0
    %1675 = vmatpush1.msra.mxu0 0.0
    %1676 = vmatprep.subr.mxu0 0.0
    %1677 = vmatpush1.msra.mxu0 0.0
    %1678 = vmatprep.subr.mxu0 0.0
    %1679 = vmatpush1.msra.mxu0 0.0
    %1680 = vmatprep.subr.mxu0 0.0
    %1681 = vmatpush1.msra.mxu0 0.0
    %1682 = vmatprep.subr.mxu0 0.0
    %1683 = vmatpush1.msra.mxu0 0.0
    %1684 = vmatprep.subr.mxu0 0.0
    %1685 = vmatpush1.msra.mxu0 0.0
    %1686 = vmatprep.mubr.f32.mxu0 0.0
    %1687 = vmatmul.mubr.f32.gmra.mrb[0].mxu0 %v1573
    %v1688 = vpop.f32.mrb[0].mxu0
    %v1689 = vadd.f32 0.0, %v1688
    %v1690 = vpop.f32.mrb[0].mxu0
    %1691 = vmatprep.mubr.f32.mxu0 0.0
    %1692 = vmatmul.mubr.f32.gmra.mrb[0].mxu0 %v1576
    %v1693 = vpop.f32.mrb[0].mxu0
    %v1694 = vadd.f32 0.0, %v1693
    %v1695 = vpop.f32.mrb[0].mxu0
    %1696 = vmatprep.mubr.f32.mxu0 0.0
    %1697 = vmatmul.mubr.f32.gmra.mrb[0].mxu0 %v1579
    %v1698 = vpop.f32.mrb[0].mxu0
    %v1699 = vadd.f32 0.0, %v1698
    %v1700 = vpop.f32.mrb[0].mxu0
    %1701 = vmatprep.mubr.f32.mxu0 0.0
    %1702 = vmatmul.mubr.f32.gmra.mrb[0].mxu0 %v1582
    %v1703 = vpop.f32.mrb[0].mxu0
    %v1704 = vadd.f32 0.0, %v1703
    %v1705 = vpop.f32.mrb[0].mxu0
    %1706 = vmatprep.mubr.f32.mxu0 0.0
    %1707 = vmatmul.mubr.f32.gmra.mrb[0].mxu0 %v1585
    %v1708 = vpop.f32.mrb[0].mxu0
    %v1709 = vadd.f32 0.0, %v1708
    %v1710 = vpop.f32.mrb[0].mxu0
    %1711 = vmatprep.mubr.f32.mxu0 0.0
    %1712 = vmatmul.mubr.f32.gmra.mrb[0].mxu0 %v1588
    %v1713 = vpop.f32.mrb[0].mxu0
    %v1714 = vadd.f32 0.0, %v1713
    %v1715 = vpop.f32.mrb[0].mxu0
    %1716 = vmatprep.mubr.f32.mxu0 0.0
    %1717 = vmatmul.mubr.f32.gmra.mrb[0].mxu0 %v1591
    %v1718 = vpop.f32.mrb[0].mxu0
    %v1719 = vadd.f32 0.0, %v1718
    %v1720 = vpop.f32.mrb[0].mxu0
    %1721 = vmatprep.mubr.f32.mxu0 0.0
    %1722 = vmatmul.mubr.f32.gmra.mrb[0].mxu0 %v1594
    %v1723 = vpop.f32.mrb[0].mxu0
    %v1724 = vadd.f32 0.0, %v1723
    %v1725 = vpop.f32.mrb[0].mxu0
    %1726 = vmatprep.mubr.f32.mxu0 0.0
    %1727 = vmatmul.mubr.f32.gmra.mrb[0].mxu0 %v1597
    %v1728 = vpop.f32.mrb[0].mxu0
    %v1729 = vadd.f32 0.0, %v1728
    %v1730 = vpop.f32.mrb[0].mxu0
    %1731 = vmatprep.mubr.f32.mxu0 0.0
    %1732 = vmatmul.mubr.f32.gmra.mrb[0].mxu0 %v1600
    %v1733 = vpop.f32.mrb[0].mxu0
    %v1734 = vadd.f32 0.0, %v1733
    %v1735 = vpop.f32.mrb[0].mxu0
    %1736 = vmatprep.mubr.f32.mxu0 0.0
    %1737 = vmatmul.mubr.f32.gmra.mrb[0].mxu0 %v1603
    %v1738 = vpop.f32.mrb[0].mxu0
    %v1739 = vadd.f32 0.0, %v1738
    %v1740 = vpop.f32.mrb[0].mxu0
    %1741 = vmatprep.mubr.f32.mxu0 0.0
    %1742 = vmatmul.mubr.f32.gmra.mrb[0].mxu0 %v1606
    %v1743 = vpop.f32.mrb[0].mxu0
    %v1744 = vadd.f32 0.0, %v1743
    %v1745 = vpop.f32.mrb[0].mxu0
    %1746 = vmatprep.mubr.f32.mxu0 0.0
    %1747 = vmatmul.mubr.f32.gmra.mrb[0].mxu0 %v1609
    %v1748 = vpop.f32.mrb[0].mxu0
    %v1749 = vadd.f32 0.0, %v1748
    %v1750 = vpop.f32.mrb[0].mxu0
    %1751 = vmatprep.mubr.f32.mxu0 0.0
    %1752 = vmatmul.mubr.f32.gmra.mrb[0].mxu0 %v1612
    %v1753 = vpop.f32.mrb[0].mxu0
    %v1754 = vadd.f32 0.0, %v1753
    %v1755 = vpop.f32.mrb[0].mxu0
    %1756 = vmatprep.mubr.f32.mxu0 0.0
    %1757 = vmatmul.mubr.f32.gmra.mrb[0].mxu0 %v1615
    %v1758 = vpop.f32.mrb[0].mxu0
    %v1759 = vadd.f32 0.0, %v1758
    %v1760 = vpop.f32.mrb[0].mxu0
    %1761 = vmatprep.mubr.f32.mxu0 0.0
    %1762 = vmatmul.mubr.f32.gmra.mrb[0].mxu0 %v1618
    %v1763 = vpop.f32.mrb[0].mxu0
    %v1764 = vadd.f32 0.0, %v1763
    %v1765 = vpop.f32.mrb[0].mxu0
    %1766 = vdwg.mxu0
    %v1767 = vadd.f32 %v1477, %v1689
    %v1768 = vadd.f32 %v1482, %v1694
    %v1769 = vadd.f32 %v1487, %v1699
    %v1770 = vadd.f32 %v1492, %v1704
    %v1771 = vadd.f32 %v1497, %v1709
    %v1772 = vadd.f32 %v1502, %v1714
    %v1773 = vadd.f32 %v1507, %v1719
    %v1774 = vadd.f32 %v1512, %v1724
    %v1775 = vadd.f32 %v1517, %v1729
    %v1776 = vadd.f32 %v1522, %v1734
    %v1777 = vadd.f32 %v1527, %v1739
    %v1778 = vadd.f32 %v1532, %v1744
    %v1779 = vadd.f32 %v1537, %v1749
    %v1780 = vadd.f32 %v1542, %v1754
    %v1781 = vadd.f32 %v1547, %v1759
    %v1782 = vadd.f32 %v1552, %v1764
    %v1783 = vmul.f32 %v1767, %v1021
    %v1784 = vmul.f32 %v1768, %v1025
    %v1785 = vmul.f32 %v1769, %v1029
    %v1786 = vmul.f32 %v1770, %v1033
    %v1787 = vmul.f32 %v1771, %v1037
    %v1788 = vmul.f32 %v1772, %v1041
    %v1789 = vmul.f32 %v1773, %v1045
    %v1790 = vmul.f32 %v1774, %v1049
    %v1791 = vmul.f32 %v1775, %v1053
    %v1792 = vmul.f32 %v1776, %v1057
    %v1793 = vmul.f32 %v1777, %v1061
    %v1794 = vmul.f32 %v1778, %v1065
    %v1795 = vmul.f32 %v1779, %v1069
    %v1796 = vmul.f32 %v1780, %v1073
    %v1797 = vmul.f32 %v1781, %v1077
    %v1798 = vmul.f32 %v1782, %v1081
    %v1799 = vadd.f32 %v1783, %v1784
    %v1800 = vadd.f32 %v1799, %v1785
    %v1801 = vadd.f32 %v1800, %v1786
    %v1802 = vadd.f32 %v1801, %v1787
    %v1803 = vadd.f32 %v1802, %v1788
    %v1804 = vadd.f32 %v1803, %v1789
    %v1805 = vadd.f32 %v1804, %v1790
    %v1806 = vadd.f32 %v1805, %v1791
    %v1807 = vadd.f32 %v1806, %v1792
    %v1808 = vadd.f32 %v1807, %v1793
    %v1809 = vadd.f32 %v1808, %v1794
    %v1810 = vadd.f32 %v1809, %v1795
    %v1811 = vadd.f32 %v1810, %v1796
    %v1812 = vadd.f32 %v1811, %v1797
    %v1813 = vadd.f32 %v1812, %v1798
    %v1814 = vadd.f32 %v1813, %v261
    %s1815 = scalar_lea.vmem [#allocation11], 8
    %1816 = vst [vmem:[%s1815] sm:$0xff] %v1814
    // Predicated region
    $region42: #{avwgcn_pallas.3} parent=1 // pred_check
      _
    $region43: #{avwgcn_pallas.3} parent=1 // pred_check_branch
      %1818 = sbr.rel (0) target = $region45
    $region44: #{avwgcn_pallas.3} parent=1 // pred_region
      %s1820 = ssub.s32 256, 256
      %1821 = vsyncadd [#allocation4], %s1820
      %s1822 = sshll.u32 [#allocation11], 4
      %s1823 = int_to_ptr.vmem [resolvable:$true] %s1822
      %1828 = dma.vmem_to_hbm [thread:$0]  %s1823, 256, %s5, [#allocation4], 128, 128, 8
    $region45: #{avwgcn_pallas.3} parent=1 // pred_fallthru
      _
    // Predicated region
    $region46: #{avwgcn_pallas.3} parent=1 // pred_check
      _
    $region47: #{avwgcn_pallas.3} parent=1 // pred_check_branch
      %1830 = sbr.rel (0) target = $region49
    $region48: #{avwgcn_pallas.3} parent=1 // pred_region
      %1831 = dma.done [#allocation4], 256
    $region49: #{avwgcn_pallas.3} parent=1 // pred_fallthru
      _
    %1832 = vsyncpa [#allocation3], 1
    %1833 = vsyncpa [#allocation6], 1
    %1834 = vsyncpa [#allocation9], 1
    %1835 = vsyncpa [#allocation4], 1

</llo_original>
